<compile_context>
chip_gen: v7x
topology: tpu7x:2x2x1
jax: 0.10.0
libtpu: 0.0.40
codegen_flags: <defaults>
</compile_context>

<pallas_src>
import jax
import jax.numpy as jnp
from jax.experimental import pallas as pl
from jax.experimental.pallas import tpu as pltpu

# ---- sizes (small, consistent with the module's forward) -------------------
NUM_MET = 32        # metabolites (hypergraph nodes)
NUM_RXN = 16        # reactions (hyperedges)
R_PAD = 32          # reactions padded so every packed operator has 32 columns
NUM_GENE = 24       # genes
F_IN = 16           # metabolite_dim
HID = 32            # hidden_dim
NUM_CONV = 2        # hyperconv_num_layers
LN_EPS = 1e-5       # nn.LayerNorm default eps
OUT_LANES = 128     # lane-dense output width (last dim multiple of 128)

# ---- constant-slab row offsets (matrix blocks are 8-row aligned) -----------
A_OFF = 0                       # A = (D^-1 S)(B^-1 S^T)   (NUM_MET, NUM_MET)
R2M_OFF = A_OFF + NUM_MET       # reaction <- metabolite   (R_PAD, NUM_MET)
G2R_OFF = R2M_OFF + R_PAD       # gene <- reaction         (NUM_GENE, R_PAD)
W_OFF = G2R_OFF + NUM_GENE      # 6 weight matrices        (6*HID, HID)
V_OFF = W_OFF + 6 * HID         # 14 bias / LayerNorm rows (14, HID)
C_ROWS = V_OFF + 14             # = 294


# ---------------------------------------------------------------------------
# Pallas kernel: whole metabolite -> reaction -> gene pipeline, one invocation
# ---------------------------------------------------------------------------
def _linear_ln_tanh(x, w, b, gamma, beta):
    """nn.Linear -> nn.LayerNorm -> Tanh (Dropout = identity in eval).

    LayerNorm statistics as E[y] / E[y^2] so the two cross-lane reductions
    have no serial dependency; rsqrt goes to the EUP slot.
    """
    y = jnp.dot(x, w, preferred_element_type=jnp.float32) + b
    mu = jnp.mean(y, axis=-1, keepdims=True)
    ms = jnp.mean(y * y, axis=-1, keepdims=True)
    inv = jax.lax.rsqrt(ms - mu * mu + LN_EPS)
    return jnp.tanh((y - mu) * inv * gamma + beta)


def metabolism_kernel(x_ref, c_ref, out_ref):
    # x_ref   : (NUM_MET, HID)    metabolite feats, zero-padded F_IN -> HID
    # c_ref   : (C_ROWS, HID)     [A | R2M_pad | G2R_pad | 6 weights | 14 vecs]
    # out_ref : (NUM_GENE, OUT_LANES)  gene feats in the first HID lanes
    x = x_ref[...]

    a = c_ref[A_OFF:A_OFF + NUM_MET, :]                      # (M, M)
    r2m = c_ref[R2M_OFF:R2M_OFF + R_PAD, :]                  # (R_PAD, M)
    g2r = c_ref[G2R_OFF:G2R_OFF + NUM_GENE, :]               # (G, R_PAD)

    def w(i):  # weight matrix i, (HID, HID)
        return c_ref[W_OFF + i * HID:W_OFF + (i + 1) * HID, :]

    def v(i):  # bias / gamma / beta row i, (1, HID)
        return c_ref[V_OFF + i:V_OFF + i + 1, :]

    # --- StoichHypergraphConv layers (folded operator) + tanh, unrolled -----
    for layer in range(NUM_CONV):
        xw = jnp.dot(x, w(layer), preferred_element_type=jnp.float32)   # (M, HID)
        x = jnp.tanh(jnp.dot(a, xw, preferred_element_type=jnp.float32)
                     + v(layer))                                          # (M, HID)

    # --- reaction representations (rows >= NUM_RXN are padding; they are ----
    # --- annihilated by g2r's zero columns) ----------------------------------
    rxn = jnp.dot(r2m, x, preferred_element_type=jnp.float32)            # (R_PAD, HID)
    rxn = _linear_ln_tanh(rxn, w(2), v(2), v(3), v(4))
    rxn = _linear_ln_tanh(rxn, w(3), v(5), v(6), v(7))

    # --- gene representations -------------------------------------------------
    gene = jnp.dot(g2r, rxn, preferred_element_type=jnp.float32)         # (G, HID)
    gene = _linear_ln_tanh(gene, w(4), v(8), v(9), v(10))
    gene = _linear_ln_tanh(gene, w(5), v(11), v(12), v(13))

    # --- lane-dense store (128 lanes, unmasked vst); wrapper slices back -----
    out_ref[...] = jnp.concatenate(
        [gene, jnp.zeros((NUM_GENE, OUT_LANES - HID), jnp.float32)], axis=-1)


# ---------------------------------------------------------------------------
# Wrapper: gridless pallas_call, everything resident in VMEM (2 input DMAs)
# ---------------------------------------------------------------------------
def metabolism_processor(x_pad, const_slab):
    out = pl.pallas_call(
        metabolism_kernel,
        out_shape=jax.ShapeDtypeStruct((NUM_GENE, OUT_LANES), jnp.float32),
        in_specs=[pl.BlockSpec(memory_space=pltpu.MemorySpace.VMEM),
                  pl.BlockSpec(memory_space=pltpu.MemorySpace.VMEM)],
        out_specs=pl.BlockSpec(memory_space=pltpu.MemorySpace.VMEM),
    )(x_pad, const_slab)
    return out[:, :HID]


# ---------------------------------------------------------------------------
# Pure-JAX reference (same math, unfused / unfolded)
# ---------------------------------------------------------------------------
def _ln_tanh_ref(x, w, b, g, be):
    y = x @ w + b
    mu = y.mean(axis=-1, keepdims=True)
    var = ((y - mu) ** 2).mean(axis=-1, keepdims=True)
    return jnp.tanh((y - mu) / jnp.sqrt(var + LN_EPS) * g + be)


def reference(x0, SB, SD, R2M, G2R, params):
    (w1, b1, w2, b2,
     rw1, rb1, rg1, rbe1, rw2, rb2, rg2, rbe2,
     gw1, gb1, gg1, gbe1, gw2, gb2, gg2, gbe2) = params
    x = jnp.tanh(SD @ (SB @ (x0 @ w1)) + b1)
    x = jnp.tanh(SD @ (SB @ (x @ w2)) + b2)
    rxn = R2M @ x
    rxn = _ln_tanh_ref(rxn, rw1, rb1, rg1, rbe1)
    rxn = _ln_tanh_ref(rxn, rw2, rb2, rg2, rbe2)
    gene = G2R @ rxn
    gene = _ln_tanh_ref(gene, gw1, gb1, gg1, gbe1)
    gene = _ln_tanh_ref(gene, gw2, gb2, gg2, gbe2)
    return gene


# ---------------------------------------------------------------------------
# Glue: dense graph operators + single packed constant slab (plain JAX)
# ---------------------------------------------------------------------------
if __name__ == "__main__":
    key = jax.random.PRNGKey(0)
    ks = jax.random.split(key, 16)

    # ---- hypergraph structure: stoichiometric incidence S[m, r] ------------
    # TODO(synk): dense incidence merges duplicate (metabolite, reaction)
    # entries; the synthetic graph here has unique pairs so semantics match.
    mask = jax.random.uniform(ks[0], (NUM_MET, NUM_RXN)) < 0.3
    mask = mask.at[jnp.arange(NUM_MET), jnp.arange(NUM_MET) % NUM_RXN].set(True)
    sto = jax.random.normal(ks[1], (NUM_MET, NUM_RXN))
    sto = jnp.where(jnp.abs(sto) < 0.1, 0.5, sto)
    S = jnp.where(mask, sto, 0.0).astype(jnp.float32)          # (M, R)

    # StoichHypergraphConv normalizations (|stoich| degrees, 1/0 -> 0)
    D = jnp.sum(jnp.abs(S), axis=1)                            # node degree (M,)
    B = jnp.sum(jnp.abs(S), axis=0)                            # edge degree (R,)
    d_inv = jnp.where(D > 0, 1.0 / D, 0.0)
    b_inv = jnp.where(B > 0, 1.0 / B, 0.0)
    SB = (S * b_inv[None, :]).T                                # (R, M)
    SD = S * d_inv[:, None]                                    # (M, R)
    A = SD @ SB                                                # (M, M) folded op

    # reaction -> metabolite pooling (forward's explicit normalization, +1e-8)
    r_sizes = jnp.sum(jnp.abs(S.T), axis=1, keepdims=True)
    R2M = S.T / (r_sizes + 1e-8)                               # (R, M)

    # reaction -> genes mapping (densified from a dict-like index list)
    g_idx = jnp.concatenate([(2 * jnp.arange(NUM_RXN)) % NUM_GENE,
                             (2 * jnp.arange(NUM_RXN) + 7) % NUM_GENE])
    r_idx = jnp.concatenate([jnp.arange(NUM_RXN), jnp.arange(NUM_RXN)])
    G2R_raw = jnp.zeros((NUM_GENE, NUM_RXN), jnp.float32).at[g_idx, r_idx].add(1.0)
    gene_counts = jnp.sum(G2R_raw, axis=1, keepdims=True)
    G2R = G2R_raw / (gene_counts + 1e-8)                       # (G, R)

    # ---- metabolite features (forward draws these with torch.randn) --------
    x0 = jax.random.normal(ks[2], (NUM_MET, F_IN), jnp.float32)

    # ---- parameters ----------------------------------------------------------
    def lin(k, i, o, scale=0.2):
        kw, kb = jax.random.split(k)
        return (jax.random.normal(kw, (i, o), jnp.float32) * scale,
                jax.random.normal(kb, (o,), jnp.float32) * scale)

    def ln_params(k):
        kg, kb = jax.random.split(k)
        return (1.0 + 0.1 * jax.random.normal(kg, (HID,), jnp.float32),
                0.1 * jax.random.normal(kb, (HID,), jnp.float32))

    w1, b1 = lin(ks[3], F_IN, HID)          # StoichHypergraphConv 1
    w2, b2 = lin(ks[4], HID, HID)           # StoichHypergraphConv 2
    rw1, rb1 = lin(ks[5], HID, HID); rg1, rbe1 = ln_params(ks[6])   # reaction SetNet
    rw2, rb2 = lin(ks[7], HID, HID); rg2, rbe2 = ln_params(ks[8])
    gw1, gb1 = lin(ks[9], HID, HID); gg1, gbe1 = ln_params(ks[10])  # gene SetNet
    gw2, gb2 = lin(ks[11], HID, HID); gg2, gbe2 = ln_params(ks[12])

    # ---- pack kernel inputs: 2 DMAs total (features + one constant slab) ----
    x0_pad = jnp.pad(x0, ((0, 0), (0, HID - F_IN)))            # (M, HID)
    w1_pad = jnp.pad(w1, ((0, HID - F_IN), (0, 0)))            # (HID, HID)
    R2M_pad = jnp.pad(R2M, ((0, R_PAD - NUM_RXN), (0, 0)))     # (R_PAD, M)
    G2R_pad = jnp.pad(G2R, ((0, 0), (0, R_PAD - NUM_RXN)))     # (G, R_PAD)
    v_rows = jnp.stack([b1, b2,
                        rb1, rg1, rbe1, rb2, rg2, rbe2,
                        gb1, gg1, gbe1, gb2, gg2, gbe2], axis=0)        # (14, HID)
    const_slab = jnp.concatenate(
        [A, R2M_pad, G2R_pad,
         w1_pad, w2, rw1, rw2, gw1, gw2,
         v_rows], axis=0)                                       # (C_ROWS, HID)
    assert const_slab.shape == (C_ROWS, HID)

    # ---- run -----------------------------------------------------------------
    out = metabolism_processor(x0_pad, const_slab)
    out = jax.block_until_ready(out)

    ref = reference(x0, SB, SD, R2M, G2R,
                    (w1, b1, w2, b2,
                     rw1, rb1, rg1, rbe1, rw2, rb2, rg2, rbe2,
                     gw1, gb1, gg1, gbe1, gw2, gb2, gg2, gbe2))

    assert out.shape == (NUM_GENE, HID)
    assert jnp.allclose(out, ref, rtol=5e-4, atol=5e-4), \
        float(jnp.max(jnp.abs(out - ref)))

    print("KERNEL_OK")
</pallas_src>

<mosaic_0001>
module attributes {stable_mosaic.version = 11 : i64} {
  func.func @metabolism_kernel(%arg0: memref<32x32xf32, #tpu.memory_space<vmem>>, %arg1: memref<294x32xf32, #tpu.memory_space<vmem>>, %arg2: memref<24x128xf32, #tpu.memory_space<vmem>>) attributes {dimension_semantics = [], scalar_prefetch = 0 : i64, scratch_operands = 0 : i64, tpu.core_type = #tpu.core_type<tc>} {
    %c0 = arith.constant 0 : index
    %c0_0 = arith.constant 0 : index
    %0 = vector.load %arg0[%c0, %c0_0] : memref<32x32xf32, #tpu.memory_space<vmem>>, vector<32x32xf32>
    %c0_1 = arith.constant 0 : index
    %c0_2 = arith.constant 0 : index
    %1 = vector.load %arg1[%c0_1, %c0_2] : memref<294x32xf32, #tpu.memory_space<vmem>>, vector<32x32xf32>
    %c32 = arith.constant 32 : index
    %c0_3 = arith.constant 0 : index
    %2 = vector.load %arg1[%c32, %c0_3] : memref<294x32xf32, #tpu.memory_space<vmem>>, vector<32x32xf32>
    %c64 = arith.constant 64 : index
    %c0_4 = arith.constant 0 : index
    %3 = vector.load %arg1[%c64, %c0_4] : memref<294x32xf32, #tpu.memory_space<vmem>>, vector<24x32xf32>
    %c88 = arith.constant 88 : index
    %c0_5 = arith.constant 0 : index
    %4 = vector.load %arg1[%c88, %c0_5] : memref<294x32xf32, #tpu.memory_space<vmem>>, vector<32x32xf32>
    %cst = arith.constant dense<0.000000e+00> : vector<32x32xf32>
    %5 = tpu.matmul %0, %4, %cst {dimension_numbers = #tpu.dot_dimension_numbers<[1], [0], [0], [1], [0, 0, 1, 1], [], []>} : vector<32x32xf32>, vector<32x32xf32>, vector<32x32xf32> -> vector<32x32xf32>
    %cst_6 = arith.constant dense<0.000000e+00> : vector<32x32xf32>
    %6 = tpu.matmul %1, %5, %cst_6 {dimension_numbers = #tpu.dot_dimension_numbers<[1], [0], [0], [1], [0, 0, 1, 1], [], []>} : vector<32x32xf32>, vector<32x32xf32>, vector<32x32xf32> -> vector<32x32xf32>
    %c280 = arith.constant 280 : index
    %c0_7 = arith.constant 0 : index
    %7 = vector.load %arg1[%c280, %c0_7] : memref<294x32xf32, #tpu.memory_space<vmem>>, vector<1x32xf32>
    %8 = vector.broadcast %7 : vector<1x32xf32> to vector<32x32xf32>
    %9 = arith.addf %6, %8 : vector<32x32xf32>
    %10 = math.tanh %9 : vector<32x32xf32>
    %c120 = arith.constant 120 : index
    %c0_8 = arith.constant 0 : index
    %11 = vector.load %arg1[%c120, %c0_8] : memref<294x32xf32, #tpu.memory_space<vmem>>, vector<32x32xf32>
    %cst_9 = arith.constant dense<0.000000e+00> : vector<32x32xf32>
    %12 = tpu.matmul %10, %11, %cst_9 {dimension_numbers = #tpu.dot_dimension_numbers<[1], [0], [0], [1], [0, 0, 1, 1], [], []>} : vector<32x32xf32>, vector<32x32xf32>, vector<32x32xf32> -> vector<32x32xf32>
    %cst_10 = arith.constant dense<0.000000e+00> : vector<32x32xf32>
    %13 = tpu.matmul %1, %12, %cst_10 {dimension_numbers = #tpu.dot_dimension_numbers<[1], [0], [0], [1], [0, 0, 1, 1], [], []>} : vector<32x32xf32>, vector<32x32xf32>, vector<32x32xf32> -> vector<32x32xf32>
    %c281 = arith.constant 281 : index
    %c0_11 = arith.constant 0 : index
    %14 = vector.load %arg1[%c281, %c0_11] : memref<294x32xf32, #tpu.memory_space<vmem>>, vector<1x32xf32>
    %15 = vector.broadcast %14 : vector<1x32xf32> to vector<32x32xf32>
    %16 = arith.addf %13, %15 : vector<32x32xf32>
    %17 = math.tanh %16 : vector<32x32xf32>
    %cst_12 = arith.constant dense<0.000000e+00> : vector<32x32xf32>
    %18 = tpu.matmul %2, %17, %cst_12 {dimension_numbers = #tpu.dot_dimension_numbers<[1], [0], [0], [1], [0, 0, 1, 1], [], []>} : vector<32x32xf32>, vector<32x32xf32>, vector<32x32xf32> -> vector<32x32xf32>
    %c152 = arith.constant 152 : index
    %c0_13 = arith.constant 0 : index
    %19 = vector.load %arg1[%c152, %c0_13] : memref<294x32xf32, #tpu.memory_space<vmem>>, vector<32x32xf32>
    %c282 = arith.constant 282 : index
    %c0_14 = arith.constant 0 : index
    %20 = vector.load %arg1[%c282, %c0_14] : memref<294x32xf32, #tpu.memory_space<vmem>>, vector<1x32xf32>
    %c283 = arith.constant 283 : index
    %c0_15 = arith.constant 0 : index
    %21 = vector.load %arg1[%c283, %c0_15] : memref<294x32xf32, #tpu.memory_space<vmem>>, vector<1x32xf32>
    %c284 = arith.constant 284 : index
    %c0_16 = arith.constant 0 : index
    %22 = vector.load %arg1[%c284, %c0_16] : memref<294x32xf32, #tpu.memory_space<vmem>>, vector<1x32xf32>
    %cst_17 = arith.constant dense<0.000000e+00> : vector<32x32xf32>
    %23 = tpu.matmul %18, %19, %cst_17 {dimension_numbers = #tpu.dot_dimension_numbers<[1], [0], [0], [1], [0, 0, 1, 1], [], []>} : vector<32x32xf32>, vector<32x32xf32>, vector<32x32xf32> -> vector<32x32xf32>
    %24 = vector.broadcast %20 : vector<1x32xf32> to vector<32x32xf32>
    %25 = arith.addf %23, %24 : vector<32x32xf32>
    %cst_18 = arith.constant dense<0.000000e+00> : vector<32xf32>
    %26 = vector.multi_reduction <add>, %25, %cst_18 [1] : vector<32x32xf32> to vector<32xf32>
    %27 = vector.shape_cast %26 : vector<32xf32> to vector<32x1xf32>
    %cst_19 = arith.constant 3.200000e+01 : f32
    %28 = vector.broadcast %cst_19 : f32 to vector<32x1xf32>
    %29 = arith.divf %27, %28 : vector<32x1xf32>
    %30 = arith.mulf %25, %25 : vector<32x32xf32>
    %cst_20 = arith.constant dense<0.000000e+00> : vector<32xf32>
    %31 = vector.multi_reduction <add>, %30, %cst_20 [1] : vector<32x32xf32> to vector<32xf32>
    %32 = vector.shape_cast %31 : vector<32xf32> to vector<32x1xf32>
    %cst_21 = arith.constant 3.200000e+01 : f32
    %33 = vector.broadcast %cst_21 : f32 to vector<32x1xf32>
    %34 = arith.divf %32, %33 : vector<32x1xf32>
    %35 = arith.mulf %29, %29 : vector<32x1xf32>
    %36 = arith.subf %34, %35 : vector<32x1xf32>
    %cst_22 = arith.constant 9.99999974E-6 : f32
    %37 = vector.broadcast %cst_22 : f32 to vector<32x1xf32>
    %38 = arith.addf %36, %37 : vector<32x1xf32>
    %39 = math.rsqrt %38 : vector<32x1xf32>
    %40 = vector.broadcast %29 : vector<32x1xf32> to vector<32x32xf32>
    %41 = arith.subf %25, %40 : vector<32x32xf32>
    %42 = vector.broadcast %39 : vector<32x1xf32> to vector<32x32xf32>
    %43 = arith.mulf %41, %42 : vector<32x32xf32>
    %44 = vector.broadcast %21 : vector<1x32xf32> to vector<32x32xf32>
    %45 = arith.mulf %43, %44 : vector<32x32xf32>
    %46 = vector.broadcast %22 : vector<1x32xf32> to vector<32x32xf32>
    %47 = arith.addf %45, %46 : vector<32x32xf32>
    %48 = math.tanh %47 : vector<32x32xf32>
    %c184 = arith.constant 184 : index
    %c0_23 = arith.constant 0 : index
    %49 = vector.load %arg1[%c184, %c0_23] : memref<294x32xf32, #tpu.memory_space<vmem>>, vector<32x32xf32>
    %c285 = arith.constant 285 : index
    %c0_24 = arith.constant 0 : index
    %50 = vector.load %arg1[%c285, %c0_24] : memref<294x32xf32, #tpu.memory_space<vmem>>, vector<1x32xf32>
    %c286 = arith.constant 286 : index
    %c0_25 = arith.constant 0 : index
    %51 = vector.load %arg1[%c286, %c0_25] : memref<294x32xf32, #tpu.memory_space<vmem>>, vector<1x32xf32>
    %c287 = arith.constant 287 : index
    %c0_26 = arith.constant 0 : index
    %52 = vector.load %arg1[%c287, %c0_26] : memref<294x32xf32, #tpu.memory_space<vmem>>, vector<1x32xf32>
    %cst_27 = arith.constant dense<0.000000e+00> : vector<32x32xf32>
    %53 = tpu.matmul %48, %49, %cst_27 {dimension_numbers = #tpu.dot_dimension_numbers<[1], [0], [0], [1], [0, 0, 1, 1], [], []>} : vector<32x32xf32>, vector<32x32xf32>, vector<32x32xf32> -> vector<32x32xf32>
    %54 = vector.broadcast %50 : vector<1x32xf32> to vector<32x32xf32>
    %55 = arith.addf %53, %54 : vector<32x32xf32>
    %cst_28 = arith.constant dense<0.000000e+00> : vector<32xf32>
    %56 = vector.multi_reduction <add>, %55, %cst_28 [1] : vector<32x32xf32> to vector<32xf32>
    %57 = vector.shape_cast %56 : vector<32xf32> to vector<32x1xf32>
    %cst_29 = arith.constant 3.200000e+01 : f32
    %58 = vector.broadcast %cst_29 : f32 to vector<32x1xf32>
    %59 = arith.divf %57, %58 : vector<32x1xf32>
    %60 = arith.mulf %55, %55 : vector<32x32xf32>
    %cst_30 = arith.constant dense<0.000000e+00> : vector<32xf32>
    %61 = vector.multi_reduction <add>, %60, %cst_30 [1] : vector<32x32xf32> to vector<32xf32>
    %62 = vector.shape_cast %61 : vector<32xf32> to vector<32x1xf32>
    %cst_31 = arith.constant 3.200000e+01 : f32
    %63 = vector.broadcast %cst_31 : f32 to vector<32x1xf32>
    %64 = arith.divf %62, %63 : vector<32x1xf32>
    %65 = arith.mulf %59, %59 : vector<32x1xf32>
    %66 = arith.subf %64, %65 : vector<32x1xf32>
    %cst_32 = arith.constant 9.99999974E-6 : f32
    %67 = vector.broadcast %cst_32 : f32 to vector<32x1xf32>
    %68 = arith.addf %66, %67 : vector<32x1xf32>
    %69 = math.rsqrt %68 : vector<32x1xf32>
    %70 = vector.broadcast %59 : vector<32x1xf32> to vector<32x32xf32>
    %71 = arith.subf %55, %70 : vector<32x32xf32>
    %72 = vector.broadcast %69 : vector<32x1xf32> to vector<32x32xf32>
    %73 = arith.mulf %71, %72 : vector<32x32xf32>
    %74 = vector.broadcast %51 : vector<1x32xf32> to vector<32x32xf32>
    %75 = arith.mulf %73, %74 : vector<32x32xf32>
    %76 = vector.broadcast %52 : vector<1x32xf32> to vector<32x32xf32>
    %77 = arith.addf %75, %76 : vector<32x32xf32>
    %78 = math.tanh %77 : vector<32x32xf32>
    %cst_33 = arith.constant dense<0.000000e+00> : vector<24x32xf32>
    %79 = tpu.matmul %3, %78, %cst_33 {dimension_numbers = #tpu.dot_dimension_numbers<[1], [0], [0], [1], [0, 0, 1, 1], [], []>} : vector<24x32xf32>, vector<32x32xf32>, vector<24x32xf32> -> vector<24x32xf32>
    %c216 = arith.constant 216 : index
    %c0_34 = arith.constant 0 : index
    %80 = vector.load %arg1[%c216, %c0_34] : memref<294x32xf32, #tpu.memory_space<vmem>>, vector<32x32xf32>
    %c288 = arith.constant 288 : index
    %c0_35 = arith.constant 0 : index
    %81 = vector.load %arg1[%c288, %c0_35] : memref<294x32xf32, #tpu.memory_space<vmem>>, vector<1x32xf32>
    %c289 = arith.constant 289 : index
    %c0_36 = arith.constant 0 : index
    %82 = vector.load %arg1[%c289, %c0_36] : memref<294x32xf32, #tpu.memory_space<vmem>>, vector<1x32xf32>
    %c290 = arith.constant 290 : index
    %c0_37 = arith.constant 0 : index
    %83 = vector.load %arg1[%c290, %c0_37] : memref<294x32xf32, #tpu.memory_space<vmem>>, vector<1x32xf32>
    %cst_38 = arith.constant dense<0.000000e+00> : vector<24x32xf32>
    %84 = tpu.matmul %79, %80, %cst_38 {dimension_numbers = #tpu.dot_dimension_numbers<[1], [0], [0], [1], [0, 0, 1, 1], [], []>} : vector<24x32xf32>, vector<32x32xf32>, vector<24x32xf32> -> vector<24x32xf32>
    %85 = vector.broadcast %81 : vector<1x32xf32> to vector<24x32xf32>
    %86 = arith.addf %84, %85 : vector<24x32xf32>
    %cst_39 = arith.constant dense<0.000000e+00> : vector<24xf32>
    %87 = vector.multi_reduction <add>, %86, %cst_39 [1] : vector<24x32xf32> to vector<24xf32>
    %88 = vector.shape_cast %87 : vector<24xf32> to vector<24x1xf32>
    %cst_40 = arith.constant 3.200000e+01 : f32
    %89 = vector.broadcast %cst_40 : f32 to vector<24x1xf32>
    %90 = arith.divf %88, %89 : vector<24x1xf32>
    %91 = arith.mulf %86, %86 : vector<24x32xf32>
    %cst_41 = arith.constant dense<0.000000e+00> : vector<24xf32>
    %92 = vector.multi_reduction <add>, %91, %cst_41 [1] : vector<24x32xf32> to vector<24xf32>
    %93 = vector.shape_cast %92 : vector<24xf32> to vector<24x1xf32>
    %cst_42 = arith.constant 3.200000e+01 : f32
    %94 = vector.broadcast %cst_42 : f32 to vector<24x1xf32>
    %95 = arith.divf %93, %94 : vector<24x1xf32>
    %96 = arith.mulf %90, %90 : vector<24x1xf32>
    %97 = arith.subf %95, %96 : vector<24x1xf32>
    %cst_43 = arith.constant 9.99999974E-6 : f32
    %98 = vector.broadcast %cst_43 : f32 to vector<24x1xf32>
    %99 = arith.addf %97, %98 : vector<24x1xf32>
    %100 = math.rsqrt %99 : vector<24x1xf32>
    %101 = vector.broadcast %90 : vector<24x1xf32> to vector<24x32xf32>
    %102 = arith.subf %86, %101 : vector<24x32xf32>
    %103 = vector.broadcast %100 : vector<24x1xf32> to vector<24x32xf32>
    %104 = arith.mulf %102, %103 : vector<24x32xf32>
    %105 = vector.broadcast %82 : vector<1x32xf32> to vector<24x32xf32>
    %106 = arith.mulf %104, %105 : vector<24x32xf32>
    %107 = vector.broadcast %83 : vector<1x32xf32> to vector<24x32xf32>
    %108 = arith.addf %106, %107 : vector<24x32xf32>
    %109 = math.tanh %108 : vector<24x32xf32>
    %c248 = arith.constant 248 : index
    %c0_44 = arith.constant 0 : index
    %110 = vector.load %arg1[%c248, %c0_44] : memref<294x32xf32, #tpu.memory_space<vmem>>, vector<32x32xf32>
    %c291 = arith.constant 291 : index
    %c0_45 = arith.constant 0 : index
    %111 = vector.load %arg1[%c291, %c0_45] : memref<294x32xf32, #tpu.memory_space<vmem>>, vector<1x32xf32>
    %c292 = arith.constant 292 : index
    %c0_46 = arith.constant 0 : index
    %112 = vector.load %arg1[%c292, %c0_46] : memref<294x32xf32, #tpu.memory_space<vmem>>, vector<1x32xf32>
    %c293 = arith.constant 293 : index
    %c0_47 = arith.constant 0 : index
    %113 = vector.load %arg1[%c293, %c0_47] : memref<294x32xf32, #tpu.memory_space<vmem>>, vector<1x32xf32>
    %cst_48 = arith.constant dense<0.000000e+00> : vector<24x32xf32>
    %114 = tpu.matmul %109, %110, %cst_48 {dimension_numbers = #tpu.dot_dimension_numbers<[1], [0], [0], [1], [0, 0, 1, 1], [], []>} : vector<24x32xf32>, vector<32x32xf32>, vector<24x32xf32> -> vector<24x32xf32>
    %115 = vector.broadcast %111 : vector<1x32xf32> to vector<24x32xf32>
    %116 = arith.addf %114, %115 : vector<24x32xf32>
    %cst_49 = arith.constant dense<0.000000e+00> : vector<24xf32>
    %117 = vector.multi_reduction <add>, %116, %cst_49 [1] : vector<24x32xf32> to vector<24xf32>
    %118 = vector.shape_cast %117 : vector<24xf32> to vector<24x1xf32>
    %cst_50 = arith.constant 3.200000e+01 : f32
    %119 = vector.broadcast %cst_50 : f32 to vector<24x1xf32>
    %120 = arith.divf %118, %119 : vector<24x1xf32>
    %121 = arith.mulf %116, %116 : vector<24x32xf32>
    %cst_51 = arith.constant dense<0.000000e+00> : vector<24xf32>
    %122 = vector.multi_reduction <add>, %121, %cst_51 [1] : vector<24x32xf32> to vector<24xf32>
    %123 = vector.shape_cast %122 : vector<24xf32> to vector<24x1xf32>
    %cst_52 = arith.constant 3.200000e+01 : f32
    %124 = vector.broadcast %cst_52 : f32 to vector<24x1xf32>
    %125 = arith.divf %123, %124 : vector<24x1xf32>
    %126 = arith.mulf %120, %120 : vector<24x1xf32>
    %127 = arith.subf %125, %126 : vector<24x1xf32>
    %cst_53 = arith.constant 9.99999974E-6 : f32
    %128 = vector.broadcast %cst_53 : f32 to vector<24x1xf32>
    %129 = arith.addf %127, %128 : vector<24x1xf32>
    %130 = math.rsqrt %129 : vector<24x1xf32>
    %131 = vector.broadcast %120 : vector<24x1xf32> to vector<24x32xf32>
    %132 = arith.subf %116, %131 : vector<24x32xf32>
    %133 = vector.broadcast %130 : vector<24x1xf32> to vector<24x32xf32>
    %134 = arith.mulf %132, %133 : vector<24x32xf32>
    %135 = vector.broadcast %112 : vector<1x32xf32> to vector<24x32xf32>
    %136 = arith.mulf %134, %135 : vector<24x32xf32>
    %137 = vector.broadcast %113 : vector<1x32xf32> to vector<24x32xf32>
    %138 = arith.addf %136, %137 : vector<24x32xf32>
    %139 = math.tanh %138 : vector<24x32xf32>
    %cst_54 = arith.constant 0.000000e+00 : f32
    %140 = vector.broadcast %cst_54 : f32 to vector<24x96xf32>
    %141 = tpu.concatenate %139, %140 in 1 : vector<24x32xf32>, vector<24x96xf32> -> vector<24x128xf32>
    %c0_55 = arith.constant 0 : index
    %c0_56 = arith.constant 0 : index
    %142 = vector.load %arg2[%c0_55, %c0_56] : memref<24x128xf32, #tpu.memory_space<vmem>>, vector<24x128xf32>
    tpu.vector_store %arg2[%c0_55, %c0_56], %141 {strides = array<i32>} : memref<24x128xf32, #tpu.memory_space<vmem>>, vector<24x128xf32>,
    return
  }
}

</mosaic_0001>

<llo_original>
// kernel: tpu_custom_call.1
$region0: #{tpu_custom_call.1}
  #allocation0 [shape = 'u32[]', space=smem, size = 0x4, offset = 0x4, fixed_abs, tag = 'smem constant byte address 0x4 - core index']
  #allocation1 [shape = 'u32[144,128]{1,0:T(1,128)}', space=vmem, size = 0x12000, scoped, tag = 'internal scratch']
  %s0 = inlined_call_operand.vmem [shape: f32[32,32], index: 0, kind: input, shape index: {}]
  %s1 = inlined_call_operand.vmem [shape: f32[294,32], index: 1, kind: input, shape index: {}]
  %s2 = inlined_call_operand.hbm [shape: f32[24,128], index: 2, kind: output, shape index: {}]
  %s3 = sld [smem:[#allocation0]]
  $region18: #{tpu_custom_call.1} parent=0
    _
  %s5 = ssub.s32 1, %s3
  %s6 = scalar_select 0, %s5, %s3
  $region1: #{tpu_custom_call.1} parent=0
    #allocation2 [shape = 'u8[12288]{0}', space=vmem, size = 0x3000, scoped, tag = 'output window, operand 0, single buffered']
    #allocation3 [shape = 's32[1]{0}', space=sflag, size = 0x4, scoped, tag = 'scoped memory for tpu_custom_call.1']
    %7 = vsyncpa [#allocation3], 0
    // Predicated region
    $region2: #{tpu_custom_call.1} parent=1 // pred_check
      _
    $region3: #{tpu_custom_call.1} parent=1 // pred_check_branch
      %9 = sbr.rel (0) target = $region5
    $region4: #{tpu_custom_call.1} parent=1 // pred_region
      _
    $region5: #{tpu_custom_call.1} parent=1 // pred_fallthru
      _
    // Predicated region
    $region6: #{tpu_custom_call.1} parent=1 // pred_check
      _
    $region7: #{tpu_custom_call.1} parent=1 // pred_check_branch
      %11 = sbr.rel (0) target = $region9
    $region8: #{tpu_custom_call.1} parent=1 // pred_region
      _
    $region9: #{tpu_custom_call.1} parent=1 // pred_fallthru
      _
    %v12 = vld [vmem:[%s0] sm:$0xff]
    %v13 = vld [vmem:[%s0 + $0x8] sm:$0xff]
    %v14 = vld [vmem:[%s0 + $0x10] sm:$0xff]
    %v15 = vld [vmem:[%s0 + $0x18] sm:$0xff]
    %v16 = vld [vmem:[%s1] sm:$0xff]
    %v17 = vld [vmem:[%s1 + $0x8] sm:$0xff]
    %v18 = vld [vmem:[%s1 + $0x10] sm:$0xff]
    %v19 = vld [vmem:[%s1 + $0x18] sm:$0xff]
    %v20 = vld [vmem:[%s1 + $0x20] sm:$0xff]
    %v21 = vld [vmem:[%s1 + $0x28] sm:$0xff]
    %v22 = vld [vmem:[%s1 + $0x30] sm:$0xff]
    %v23 = vld [vmem:[%s1 + $0x38] sm:$0xff]
    %v24 = vld [vmem:[%s1 + $0x40] sm:$0xff]
    %v25 = vld [vmem:[%s1 + $0x48] sm:$0xff]
    %v26 = vld [vmem:[%s1 + $0x50] sm:$0xff]
    %v27 = vld [vmem:[%s1 + $0x58] sm:$0xff]
    %v28 = vld [vmem:[%s1 + $0x60] sm:$0xff]
    %v29 = vld [vmem:[%s1 + $0x68] sm:$0xff]
    %v30 = vld [vmem:[%s1 + $0x70] sm:$0xff]
    %vm31 = vcmask 261120
    %v33 = vsel %vm31, %v12, 0
    %v36 = vsel %vm31, %v13, 0
    %v39 = vsel %vm31, %v14, 0
    %v42 = vsel %vm31, %v15, 0
    %44 = vmatprep.subr.mxu0 0.0
    %45 = vmatpush1.msra.mxu0 %v27
    %46 = vmatprep.subr.mxu0 0.0
    %47 = vmatpush1.msra.mxu0 %v28
    %48 = vmatprep.subr.mxu0 0.0
    %49 = vmatpush1.msra.mxu0 %v29
    %50 = vmatprep.subr.mxu0 0.0
    %51 = vmatpush1.msra.mxu0 %v30
    %52 = vmatprep.subr.mxu0 0.0
    %53 = vmatpush1.msra.mxu0 0.0
    %54 = vmatprep.subr.mxu0 0.0
    %55 = vmatpush1.msra.mxu0 0.0
    %56 = vmatprep.subr.mxu0 0.0
    %57 = vmatpush1.msra.mxu0 0.0
    %58 = vmatprep.subr.mxu0 0.0
    %59 = vmatpush1.msra.mxu0 0.0
    %60 = vmatprep.subr.mxu0 0.0
    %61 = vmatpush1.msra.mxu0 0.0
    %62 = vmatprep.subr.mxu0 0.0
    %63 = vmatpush1.msra.mxu0 0.0
    %64 = vmatprep.subr.mxu0 0.0
    %65 = vmatpush1.msra.mxu0 0.0
    %66 = vmatprep.subr.mxu0 0.0
    %67 = vmatpush1.msra.mxu0 0.0
    %68 = vmatprep.subr.mxu0 0.0
    %69 = vmatpush1.msra.mxu0 0.0
    %70 = vmatprep.subr.mxu0 0.0
    %71 = vmatpush1.msra.mxu0 0.0
    %72 = vmatprep.subr.mxu0 0.0
    %73 = vmatpush1.msra.mxu0 0.0
    %74 = vmatprep.subr.mxu0 0.0
    %75 = vmatpush1.msra.mxu0 0.0
    %76 = vmatprep.subr.mxu0 0.0
    %77 = vmatpush1.msra.mxu0 0.0
    %78 = vmatprep.subr.mxu0 0.0
    %79 = vmatpush1.msra.mxu0 0.0
    %80 = vmatprep.subr.mxu0 0.0
    %81 = vmatpush1.msra.mxu0 0.0
    %82 = vmatprep.subr.mxu0 0.0
    %83 = vmatpush1.msra.mxu0 0.0
    %84 = vmatprep.subr.mxu0 0.0
    %85 = vmatpush1.msra.mxu0 0.0
    %86 = vmatprep.subr.mxu0 0.0
    %87 = vmatpush1.msra.mxu0 0.0
    %88 = vmatprep.subr.mxu0 0.0
    %89 = vmatpush1.msra.mxu0 0.0
    %90 = vmatprep.subr.mxu0 0.0
    %91 = vmatpush1.msra.mxu0 0.0
    %92 = vmatprep.subr.mxu0 0.0
    %93 = vmatpush1.msra.mxu0 0.0
    %94 = vmatprep.subr.mxu0 0.0
    %95 = vmatpush1.msra.mxu0 0.0
    %96 = vmatprep.subr.mxu0 0.0
    %97 = vmatpush1.msra.mxu0 0.0
    %98 = vmatprep.subr.mxu0 0.0
    %99 = vmatpush1.msra.mxu0 0.0
    %100 = vmatprep.subr.mxu0 0.0
    %101 = vmatpush1.msra.mxu0 0.0
    %102 = vmatprep.subr.mxu0 0.0
    %103 = vmatpush1.msra.mxu0 0.0
    %104 = vmatprep.subr.mxu0 0.0
    %105 = vmatpush1.msra.mxu0 0.0
    %106 = vmatprep.subr.mxu0 0.0
    %107 = vmatpush1.msra.mxu0 0.0
    %108 = vmatprep.mubr.f32.mxu0 0.0
    %109 = vmatmul.mubr.f32.gmra.mrb[0].mxu0 %v33
    %v110 = vpop.f32.mrb[0].mxu0
    %v111 = vadd.f32 0.0, %v110
    %v112 = vpop.f32.mrb[0].mxu0
    %113 = vmatprep.mubr.f32.mxu0 0.0
    %114 = vmatmul.mubr.f32.gmra.mrb[0].mxu0 %v36
    %v115 = vpop.f32.mrb[0].mxu0
    %v116 = vadd.f32 0.0, %v115
    %v117 = vpop.f32.mrb[0].mxu0
    %118 = vmatprep.mubr.f32.mxu0 0.0
    %119 = vmatmul.mubr.f32.gmra.mrb[0].mxu0 %v39
    %v120 = vpop.f32.mrb[0].mxu0
    %v121 = vadd.f32 0.0, %v120
    %v122 = vpop.f32.mrb[0].mxu0
    %123 = vmatprep.mubr.f32.mxu0 0.0
    %124 = vmatmul.mubr.f32.gmra.mrb[0].mxu0 %v42
    %v125 = vpop.f32.mrb[0].mxu0
    %v126 = vadd.f32 0.0, %v125
    %v127 = vpop.f32.mrb[0].mxu0
    %128 = vdwg.mxu0
    %v129 = vld [vmem:[%s1 + $0x118] sm:$0x1]
    %v130 = vlaneseq
    %v131 = vshrl.u32 %v130, 7
    %v132 = vsub.s32 0, %v131
    %v133 = vrot.slane %v129, %v132
    %v135 = vsel %vm31, %v16, 0
    %v138 = vsel %vm31, %v17, 0
    %v141 = vsel %vm31, %v18, 0
    %v144 = vsel %vm31, %v19, 0
    %146 = vmatprep.subr.mxu0 0.0
    %147 = vmatpush1.msra.mxu0 %v111
    %148 = vmatprep.subr.mxu0 0.0
    %149 = vmatpush1.msra.mxu0 %v116
    %150 = vmatprep.subr.mxu0 0.0
    %151 = vmatpush1.msra.mxu0 %v121
    %152 = vmatprep.subr.mxu0 0.0
    %153 = vmatpush1.msra.mxu0 %v126
    %154 = vmatprep.subr.mxu0 0.0
    %155 = vmatpush1.msra.mxu0 0.0
    %156 = vmatprep.subr.mxu0 0.0
    %157 = vmatpush1.msra.mxu0 0.0
    %158 = vmatprep.subr.mxu0 0.0
    %159 = vmatpush1.msra.mxu0 0.0
    %160 = vmatprep.subr.mxu0 0.0
    %161 = vmatpush1.msra.mxu0 0.0
    %162 = vmatprep.subr.mxu0 0.0
    %163 = vmatpush1.msra.mxu0 0.0
    %164 = vmatprep.subr.mxu0 0.0
    %165 = vmatpush1.msra.mxu0 0.0
    %166 = vmatprep.subr.mxu0 0.0
    %167 = vmatpush1.msra.mxu0 0.0
    %168 = vmatprep.subr.mxu0 0.0
    %169 = vmatpush1.msra.mxu0 0.0
    %170 = vmatprep.subr.mxu0 0.0
    %171 = vmatpush1.msra.mxu0 0.0
    %172 = vmatprep.subr.mxu0 0.0
    %173 = vmatpush1.msra.mxu0 0.0
    %174 = vmatprep.subr.mxu0 0.0
    %175 = vmatpush1.msra.mxu0 0.0
    %176 = vmatprep.subr.mxu0 0.0
    %177 = vmatpush1.msra.mxu0 0.0
    %178 = vmatprep.subr.mxu0 0.0
    %179 = vmatpush1.msra.mxu0 0.0
    %180 = vmatprep.subr.mxu0 0.0
    %181 = vmatpush1.msra.mxu0 0.0
    %182 = vmatprep.subr.mxu0 0.0
    %183 = vmatpush1.msra.mxu0 0.0
    %184 = vmatprep.subr.mxu0 0.0
    %185 = vmatpush1.msra.mxu0 0.0
    %186 = vmatprep.subr.mxu0 0.0
    %187 = vmatpush1.msra.mxu0 0.0
    %188 = vmatprep.subr.mxu0 0.0
    %189 = vmatpush1.msra.mxu0 0.0
    %190 = vmatprep.subr.mxu0 0.0
    %191 = vmatpush1.msra.mxu0 0.0
    %192 = vmatprep.subr.mxu0 0.0
    %193 = vmatpush1.msra.mxu0 0.0
    %194 = vmatprep.subr.mxu0 0.0
    %195 = vmatpush1.msra.mxu0 0.0
    %196 = vmatprep.subr.mxu0 0.0
    %197 = vmatpush1.msra.mxu0 0.0
    %198 = vmatprep.subr.mxu0 0.0
    %199 = vmatpush1.msra.mxu0 0.0
    %200 = vmatprep.subr.mxu0 0.0
    %201 = vmatpush1.msra.mxu0 0.0
    %202 = vmatprep.subr.mxu0 0.0
    %203 = vmatpush1.msra.mxu0 0.0
    %204 = vmatprep.subr.mxu0 0.0
    %205 = vmatpush1.msra.mxu0 0.0
    %206 = vmatprep.subr.mxu0 0.0
    %207 = vmatpush1.msra.mxu0 0.0
    %208 = vmatprep.subr.mxu0 0.0
    %209 = vmatpush1.msra.mxu0 0.0
    %210 = vmatprep.mubr.f32.mxu0 0.0
    %211 = vmatmul.mubr.f32.gmra.mrb[0].mxu0 %v135
    %v212 = vpop.f32.mrb[0].mxu0
    %v213 = vadd.f32 %v133, %v212
    %v214 = vpop.f32.mrb[0].mxu0
    %215 = vmatprep.mubr.f32.mxu0 0.0
    %216 = vmatmul.mubr.f32.gmra.mrb[0].mxu0 %v138
    %v217 = vpop.f32.mrb[0].mxu0
    %v218 = vadd.f32 %v133, %v217
    %v219 = vpop.f32.mrb[0].mxu0
    %220 = vmatprep.mubr.f32.mxu0 0.0
    %221 = vmatmul.mubr.f32.gmra.mrb[0].mxu0 %v141
    %v222 = vpop.f32.mrb[0].mxu0
    %v223 = vadd.f32 %v133, %v222
    %v224 = vpop.f32.mrb[0].mxu0
    %225 = vmatprep.mubr.f32.mxu0 0.0
    %226 = vmatmul.mubr.f32.gmra.mrb[0].mxu0 %v144
    %v227 = vpop.f32.mrb[0].mxu0
    %v228 = vadd.f32 %v133, %v227
    %v229 = vpop.f32.mrb[0].mxu0
    %230 = vdwg.mxu0
    %v231 = vtanh.pop %v213
    %v232 = vtanh.pop %v218
    %v233 = vtanh.pop %v223
    %v234 = vtanh.pop %v228
    %v235 = vld [vmem:[%s1 + $0x78] sm:$0xff]
    %v236 = vld [vmem:[%s1 + $0x80] sm:$0xff]
    %v237 = vld [vmem:[%s1 + $0x88] sm:$0xff]
    %v238 = vld [vmem:[%s1 + $0x90] sm:$0xff]
    %v240 = vsel %vm31, %v231, 0
    %v243 = vsel %vm31, %v232, 0
    %v246 = vsel %vm31, %v233, 0
    %v249 = vsel %vm31, %v234, 0
    %251 = vmatprep.subr.mxu0 0.0
    %252 = vmatpush1.msra.mxu0 %v235
    %253 = vmatprep.subr.mxu0 0.0
    %254 = vmatpush1.msra.mxu0 %v236
    %255 = vmatprep.subr.mxu0 0.0
    %256 = vmatpush1.msra.mxu0 %v237
    %257 = vmatprep.subr.mxu0 0.0
    %258 = vmatpush1.msra.mxu0 %v238
    %259 = vmatprep.subr.mxu0 0.0
    %260 = vmatpush1.msra.mxu0 0.0
    %261 = vmatprep.subr.mxu0 0.0
    %262 = vmatpush1.msra.mxu0 0.0
    %263 = vmatprep.subr.mxu0 0.0
    %264 = vmatpush1.msra.mxu0 0.0
    %265 = vmatprep.subr.mxu0 0.0
    %266 = vmatpush1.msra.mxu0 0.0
    %267 = vmatprep.subr.mxu0 0.0
    %268 = vmatpush1.msra.mxu0 0.0
    %269 = vmatprep.subr.mxu0 0.0
    %270 = vmatpush1.msra.mxu0 0.0
    %271 = vmatprep.subr.mxu0 0.0
    %272 = vmatpush1.msra.mxu0 0.0
    %273 = vmatprep.subr.mxu0 0.0
    %274 = vmatpush1.msra.mxu0 0.0
    %275 = vmatprep.subr.mxu0 0.0
    %276 = vmatpush1.msra.mxu0 0.0
    %277 = vmatprep.subr.mxu0 0.0
    %278 = vmatpush1.msra.mxu0 0.0
    %279 = vmatprep.subr.mxu0 0.0
    %280 = vmatpush1.msra.mxu0 0.0
    %281 = vmatprep.subr.mxu0 0.0
    %282 = vmatpush1.msra.mxu0 0.0
    %283 = vmatprep.subr.mxu0 0.0
    %284 = vmatpush1.msra.mxu0 0.0
    %285 = vmatprep.subr.mxu0 0.0
    %286 = vmatpush1.msra.mxu0 0.0
    %287 = vmatprep.subr.mxu0 0.0
    %288 = vmatpush1.msra.mxu0 0.0
    %289 = vmatprep.subr.mxu0 0.0
    %290 = vmatpush1.msra.mxu0 0.0
    %291 = vmatprep.subr.mxu0 0.0
    %292 = vmatpush1.msra.mxu0 0.0
    %293 = vmatprep.subr.mxu0 0.0
    %294 = vmatpush1.msra.mxu0 0.0
    %295 = vmatprep.subr.mxu0 0.0
    %296 = vmatpush1.msra.mxu0 0.0
    %297 = vmatprep.subr.mxu0 0.0
    %298 = vmatpush1.msra.mxu0 0.0
    %299 = vmatprep.subr.mxu0 0.0
    %300 = vmatpush1.msra.mxu0 0.0
    %301 = vmatprep.subr.mxu0 0.0
    %302 = vmatpush1.msra.mxu0 0.0
    %303 = vmatprep.subr.mxu0 0.0
    %304 = vmatpush1.msra.mxu0 0.0
    %305 = vmatprep.subr.mxu0 0.0
    %306 = vmatpush1.msra.mxu0 0.0
    %307 = vmatprep.subr.mxu0 0.0
    %308 = vmatpush1.msra.mxu0 0.0
    %309 = vmatprep.subr.mxu0 0.0
    %310 = vmatpush1.msra.mxu0 0.0
    %311 = vmatprep.subr.mxu0 0.0
    %312 = vmatpush1.msra.mxu0 0.0
    %313 = vmatprep.subr.mxu0 0.0
    %314 = vmatpush1.msra.mxu0 0.0
    %315 = vmatprep.mubr.f32.mxu0 0.0
    %316 = vmatmul.mubr.f32.gmra.mrb[0].mxu0 %v240
    %v317 = vpop.f32.mrb[0].mxu0
    %v318 = vadd.f32 0.0, %v317
    %v319 = vpop.f32.mrb[0].mxu0
    %320 = vmatprep.mubr.f32.mxu0 0.0
    %321 = vmatmul.mubr.f32.gmra.mrb[0].mxu0 %v243
    %v322 = vpop.f32.mrb[0].mxu0
    %v323 = vadd.f32 0.0, %v322
    %v324 = vpop.f32.mrb[0].mxu0
    %325 = vmatprep.mubr.f32.mxu0 0.0
    %326 = vmatmul.mubr.f32.gmra.mrb[0].mxu0 %v246
    %v327 = vpop.f32.mrb[0].mxu0
    %v328 = vadd.f32 0.0, %v327
    %v329 = vpop.f32.mrb[0].mxu0
    %330 = vmatprep.mubr.f32.mxu0 0.0
    %331 = vmatmul.mubr.f32.gmra.mrb[0].mxu0 %v249
    %v332 = vpop.f32.mrb[0].mxu0
    %v333 = vadd.f32 0.0, %v332
    %v334 = vpop.f32.mrb[0].mxu0
    %335 = vdwg.mxu0
    %v336 = vld [vmem:[%s1 + $0x119] sm:$0x1]
    %v337 = vlaneseq
    %v338 = vshrl.u32 %v337, 7
    %v339 = vsub.s32 0, %v338
    %v340 = vrot.slane %v336, %v339
    %341 = vmatprep.subr.mxu0 0.0
    %342 = vmatpush1.msra.mxu0 %v318
    %343 = vmatprep.subr.mxu0 0.0
    %344 = vmatpush1.msra.mxu0 %v323
    %345 = vmatprep.subr.mxu0 0.0
    %346 = vmatpush1.msra.mxu0 %v328
    %347 = vmatprep.subr.mxu0 0.0
    %348 = vmatpush1.msra.mxu0 %v333
    %349 = vmatprep.subr.mxu0 0.0
    %350 = vmatpush1.msra.mxu0 0.0
    %351 = vmatprep.subr.mxu0 0.0
    %352 = vmatpush1.msra.mxu0 0.0
    %353 = vmatprep.subr.mxu0 0.0
    %354 = vmatpush1.msra.mxu0 0.0
    %355 = vmatprep.subr.mxu0 0.0
    %356 = vmatpush1.msra.mxu0 0.0
    %357 = vmatprep.subr.mxu0 0.0
    %358 = vmatpush1.msra.mxu0 0.0
    %359 = vmatprep.subr.mxu0 0.0
    %360 = vmatpush1.msra.mxu0 0.0
    %361 = vmatprep.subr.mxu0 0.0
    %362 = vmatpush1.msra.mxu0 0.0
    %363 = vmatprep.subr.mxu0 0.0
    %364 = vmatpush1.msra.mxu0 0.0
    %365 = vmatprep.subr.mxu0 0.0
    %366 = vmatpush1.msra.mxu0 0.0
    %367 = vmatprep.subr.mxu0 0.0
    %368 = vmatpush1.msra.mxu0 0.0
    %369 = vmatprep.subr.mxu0 0.0
    %370 = vmatpush1.msra.mxu0 0.0
    %371 = vmatprep.subr.mxu0 0.0
    %372 = vmatpush1.msra.mxu0 0.0
    %373 = vmatprep.subr.mxu0 0.0
    %374 = vmatpush1.msra.mxu0 0.0
    %375 = vmatprep.subr.mxu0 0.0
    %376 = vmatpush1.msra.mxu0 0.0
    %377 = vmatprep.subr.mxu0 0.0
    %378 = vmatpush1.msra.mxu0 0.0
    %379 = vmatprep.subr.mxu0 0.0
    %380 = vmatpush1.msra.mxu0 0.0
    %381 = vmatprep.subr.mxu0 0.0
    %382 = vmatpush1.msra.mxu0 0.0
    %383 = vmatprep.subr.mxu0 0.0
    %384 = vmatpush1.msra.mxu0 0.0
    %385 = vmatprep.subr.mxu0 0.0
    %386 = vmatpush1.msra.mxu0 0.0
    %387 = vmatprep.subr.mxu0 0.0
    %388 = vmatpush1.msra.mxu0 0.0
    %389 = vmatprep.subr.mxu0 0.0
    %390 = vmatpush1.msra.mxu0 0.0
    %391 = vmatprep.subr.mxu0 0.0
    %392 = vmatpush1.msra.mxu0 0.0
    %393 = vmatprep.subr.mxu0 0.0
    %394 = vmatpush1.msra.mxu0 0.0
    %395 = vmatprep.subr.mxu0 0.0
    %396 = vmatpush1.msra.mxu0 0.0
    %397 = vmatprep.subr.mxu0 0.0
    %398 = vmatpush1.msra.mxu0 0.0
    %399 = vmatprep.subr.mxu0 0.0
    %400 = vmatpush1.msra.mxu0 0.0
    %401 = vmatprep.subr.mxu0 0.0
    %402 = vmatpush1.msra.mxu0 0.0
    %403 = vmatprep.subr.mxu0 0.0
    %404 = vmatpush1.msra.mxu0 0.0
    %405 = vmatprep.mubr.f32.mxu0 0.0
    %406 = vmatmul.mubr.f32.gmra.mrb[0].mxu0 %v135
    %v407 = vpop.f32.mrb[0].mxu0
    %v408 = vadd.f32 %v340, %v407
    %v409 = vpop.f32.mrb[0].mxu0
    %410 = vmatprep.mubr.f32.mxu0 0.0
    %411 = vmatmul.mubr.f32.gmra.mrb[0].mxu0 %v138
    %v412 = vpop.f32.mrb[0].mxu0
    %v413 = vadd.f32 %v340, %v412
    %v414 = vpop.f32.mrb[0].mxu0
    %415 = vmatprep.mubr.f32.mxu0 0.0
    %416 = vmatmul.mubr.f32.gmra.mrb[0].mxu0 %v141
    %v417 = vpop.f32.mrb[0].mxu0
    %v418 = vadd.f32 %v340, %v417
    %v419 = vpop.f32.mrb[0].mxu0
    %420 = vmatprep.mubr.f32.mxu0 0.0
    %421 = vmatmul.mubr.f32.gmra.mrb[0].mxu0 %v144
    %v422 = vpop.f32.mrb[0].mxu0
    %v423 = vadd.f32 %v340, %v422
    %v424 = vpop.f32.mrb[0].mxu0
    %425 = vdwg.mxu0
    %v426 = vtanh.pop %v408
    %v427 = vtanh.pop %v413
    %v428 = vtanh.pop %v418
    %v429 = vtanh.pop %v423
    %v431 = vsel %vm31, %v20, 0
    %v434 = vsel %vm31, %v21, 0
    %v437 = vsel %vm31, %v22, 0
    %v440 = vsel %vm31, %v23, 0
    %442 = vmatprep.subr.mxu0 0.0
    %443 = vmatpush1.msra.mxu0 %v426
    %444 = vmatprep.subr.mxu0 0.0
    %445 = vmatpush1.msra.mxu0 %v427
    %446 = vmatprep.subr.mxu0 0.0
    %447 = vmatpush1.msra.mxu0 %v428
    %448 = vmatprep.subr.mxu0 0.0
    %449 = vmatpush1.msra.mxu0 %v429
    %450 = vmatprep.subr.mxu0 0.0
    %451 = vmatpush1.msra.mxu0 0.0
    %452 = vmatprep.subr.mxu0 0.0
    %453 = vmatpush1.msra.mxu0 0.0
    %454 = vmatprep.subr.mxu0 0.0
    %455 = vmatpush1.msra.mxu0 0.0
    %456 = vmatprep.subr.mxu0 0.0
    %457 = vmatpush1.msra.mxu0 0.0
    %458 = vmatprep.subr.mxu0 0.0
    %459 = vmatpush1.msra.mxu0 0.0
    %460 = vmatprep.subr.mxu0 0.0
    %461 = vmatpush1.msra.mxu0 0.0
    %462 = vmatprep.subr.mxu0 0.0
    %463 = vmatpush1.msra.mxu0 0.0
    %464 = vmatprep.subr.mxu0 0.0
    %465 = vmatpush1.msra.mxu0 0.0
    %466 = vmatprep.subr.mxu0 0.0
    %467 = vmatpush1.msra.mxu0 0.0
    %468 = vmatprep.subr.mxu0 0.0
    %469 = vmatpush1.msra.mxu0 0.0
    %470 = vmatprep.subr.mxu0 0.0
    %471 = vmatpush1.msra.mxu0 0.0
    %472 = vmatprep.subr.mxu0 0.0
    %473 = vmatpush1.msra.mxu0 0.0
    %474 = vmatprep.subr.mxu0 0.0
    %475 = vmatpush1.msra.mxu0 0.0
    %476 = vmatprep.subr.mxu0 0.0
    %477 = vmatpush1.msra.mxu0 0.0
    %478 = vmatprep.subr.mxu0 0.0
    %479 = vmatpush1.msra.mxu0 0.0
    %480 = vmatprep.subr.mxu0 0.0
    %481 = vmatpush1.msra.mxu0 0.0
    %482 = vmatprep.subr.mxu0 0.0
    %483 = vmatpush1.msra.mxu0 0.0
    %484 = vmatprep.subr.mxu0 0.0
    %485 = vmatpush1.msra.mxu0 0.0
    %486 = vmatprep.subr.mxu0 0.0
    %487 = vmatpush1.msra.mxu0 0.0
    %488 = vmatprep.subr.mxu0 0.0
    %489 = vmatpush1.msra.mxu0 0.0
    %490 = vmatprep.subr.mxu0 0.0
    %491 = vmatpush1.msra.mxu0 0.0
    %492 = vmatprep.subr.mxu0 0.0
    %493 = vmatpush1.msra.mxu0 0.0
    %494 = vmatprep.subr.mxu0 0.0
    %495 = vmatpush1.msra.mxu0 0.0
    %496 = vmatprep.subr.mxu0 0.0
    %497 = vmatpush1.msra.mxu0 0.0
    %498 = vmatprep.subr.mxu0 0.0
    %499 = vmatpush1.msra.mxu0 0.0
    %500 = vmatprep.subr.mxu0 0.0
    %501 = vmatpush1.msra.mxu0 0.0
    %502 = vmatprep.subr.mxu0 0.0
    %503 = vmatpush1.msra.mxu0 0.0
    %504 = vmatprep.subr.mxu0 0.0
    %505 = vmatpush1.msra.mxu0 0.0
    %506 = vmatprep.mubr.f32.mxu0 0.0
    %507 = vmatmul.mubr.f32.gmra.mrb[0].mxu0 %v431
    %v508 = vpop.f32.mrb[0].mxu0
    %v509 = vadd.f32 0.0, %v508
    %v510 = vpop.f32.mrb[0].mxu0
    %511 = vmatprep.mubr.f32.mxu0 0.0
    %512 = vmatmul.mubr.f32.gmra.mrb[0].mxu0 %v434
    %v513 = vpop.f32.mrb[0].mxu0
    %v514 = vadd.f32 0.0, %v513
    %v515 = vpop.f32.mrb[0].mxu0
    %516 = vmatprep.mubr.f32.mxu0 0.0
    %517 = vmatmul.mubr.f32.gmra.mrb[0].mxu0 %v437
    %v518 = vpop.f32.mrb[0].mxu0
    %v519 = vadd.f32 0.0, %v518
    %v520 = vpop.f32.mrb[0].mxu0
    %521 = vmatprep.mubr.f32.mxu0 0.0
    %522 = vmatmul.mubr.f32.gmra.mrb[0].mxu0 %v440
    %v523 = vpop.f32.mrb[0].mxu0
    %v524 = vadd.f32 0.0, %v523
    %v525 = vpop.f32.mrb[0].mxu0
    %526 = vdwg.mxu0
    %v527 = vld [vmem:[%s1 + $0x98] sm:$0xff]
    %v528 = vld [vmem:[%s1 + $0xa0] sm:$0xff]
    %v529 = vld [vmem:[%s1 + $0xa8] sm:$0xff]
    %v530 = vld [vmem:[%s1 + $0xb0] sm:$0xff]
    %v531 = vld [vmem:[%s1 + $0x11a] sm:$0x1]
    %v532 = vld [vmem:[%s1 + $0x11b] sm:$0x1]
    %v533 = vld [vmem:[%s1 + $0x11c] sm:$0x1]
    %v534 = vlaneseq
    %v535 = vshrl.u32 %v534, 7
    %v536 = vsub.s32 0, %v535
    %v537 = vrot.slane %v531, %v536
    %v539 = vsel %vm31, %v509, 0
    %v542 = vsel %vm31, %v514, 0
    %v545 = vsel %vm31, %v519, 0
    %v548 = vsel %vm31, %v524, 0
    %550 = vmatprep.subr.mxu0 0.0
    %551 = vmatpush1.msra.mxu0 %v527
    %552 = vmatprep.subr.mxu0 0.0
    %553 = vmatpush1.msra.mxu0 %v528
    %554 = vmatprep.subr.mxu0 0.0
    %555 = vmatpush1.msra.mxu0 %v529
    %556 = vmatprep.subr.mxu0 0.0
    %557 = vmatpush1.msra.mxu0 %v530
    %558 = vmatprep.subr.mxu0 0.0
    %559 = vmatpush1.msra.mxu0 0.0
    %560 = vmatprep.subr.mxu0 0.0
    %561 = vmatpush1.msra.mxu0 0.0
    %562 = vmatprep.subr.mxu0 0.0
    %563 = vmatpush1.msra.mxu0 0.0
    %564 = vmatprep.subr.mxu0 0.0
    %565 = vmatpush1.msra.mxu0 0.0
    %566 = vmatprep.subr.mxu0 0.0
    %567 = vmatpush1.msra.mxu0 0.0
    %568 = vmatprep.subr.mxu0 0.0
    %569 = vmatpush1.msra.mxu0 0.0
    %570 = vmatprep.subr.mxu0 0.0
    %571 = vmatpush1.msra.mxu0 0.0
    %572 = vmatprep.subr.mxu0 0.0
    %573 = vmatpush1.msra.mxu0 0.0
    %574 = vmatprep.subr.mxu0 0.0
    %575 = vmatpush1.msra.mxu0 0.0
    %576 = vmatprep.subr.mxu0 0.0
    %577 = vmatpush1.msra.mxu0 0.0
    %578 = vmatprep.subr.mxu0 0.0
    %579 = vmatpush1.msra.mxu0 0.0
    %580 = vmatprep.subr.mxu0 0.0
    %581 = vmatpush1.msra.mxu0 0.0
    %582 = vmatprep.subr.mxu0 0.0
    %583 = vmatpush1.msra.mxu0 0.0
    %584 = vmatprep.subr.mxu0 0.0
    %585 = vmatpush1.msra.mxu0 0.0
    %586 = vmatprep.subr.mxu0 0.0
    %587 = vmatpush1.msra.mxu0 0.0
    %588 = vmatprep.subr.mxu0 0.0
    %589 = vmatpush1.msra.mxu0 0.0
    %590 = vmatprep.subr.mxu0 0.0
    %591 = vmatpush1.msra.mxu0 0.0
    %592 = vmatprep.subr.mxu0 0.0
    %593 = vmatpush1.msra.mxu0 0.0
    %594 = vmatprep.subr.mxu0 0.0
    %595 = vmatpush1.msra.mxu0 0.0
    %596 = vmatprep.subr.mxu0 0.0
    %597 = vmatpush1.msra.mxu0 0.0
    %598 = vmatprep.subr.mxu0 0.0
    %599 = vmatpush1.msra.mxu0 0.0
    %600 = vmatprep.subr.mxu0 0.0
    %601 = vmatpush1.msra.mxu0 0.0
    %602 = vmatprep.subr.mxu0 0.0
    %603 = vmatpush1.msra.mxu0 0.0
    %604 = vmatprep.subr.mxu0 0.0
    %605 = vmatpush1.msra.mxu0 0.0
    %606 = vmatprep.subr.mxu0 0.0
    %607 = vmatpush1.msra.mxu0 0.0
    %608 = vmatprep.subr.mxu0 0.0
    %609 = vmatpush1.msra.mxu0 0.0
    %610 = vmatprep.subr.mxu0 0.0
    %611 = vmatpush1.msra.mxu0 0.0
    %612 = vmatprep.subr.mxu0 0.0
    %613 = vmatpush1.msra.mxu0 0.0
    %614 = vmatprep.mubr.f32.mxu0 0.0
    %615 = vmatmul.mubr.f32.gmra.mrb[0].mxu0 %v539
    %v616 = vpop.f32.mrb[0].mxu0
    %v617 = vadd.f32 %v537, %v616
    %v618 = vpop.f32.mrb[0].mxu0
    %619 = vmatprep.mubr.f32.mxu0 0.0
    %620 = vmatmul.mubr.f32.gmra.mrb[0].mxu0 %v542
    %v621 = vpop.f32.mrb[0].mxu0
    %v622 = vadd.f32 %v537, %v621
    %v623 = vpop.f32.mrb[0].mxu0
    %624 = vmatprep.mubr.f32.mxu0 0.0
    %625 = vmatmul.mubr.f32.gmra.mrb[0].mxu0 %v545
    %v626 = vpop.f32.mrb[0].mxu0
    %v627 = vadd.f32 %v537, %v626
    %v628 = vpop.f32.mrb[0].mxu0
    %629 = vmatprep.mubr.f32.mxu0 0.0
    %630 = vmatmul.mubr.f32.gmra.mrb[0].mxu0 %v548
    %v631 = vpop.f32.mrb[0].mxu0
    %v632 = vadd.f32 %v537, %v631
    %v633 = vpop.f32.mrb[0].mxu0
    %634 = vdwg.mxu0
    %v635 = vsel %vm31, %v617, 0.0
    %636 = vadd.xlane.f32.xlu0 %v635
    %v637 = vpop.xlane.xlu0 %636
    %v638 = vsel %vm31, %v622, 0.0
    %639 = vadd.xlane.f32.xlu0 %v638
    %v640 = vpop.xlane.xlu0 %639
    %v641 = vsel %vm31, %v627, 0.0
    %642 = vadd.xlane.f32.xlu0 %v641
    %v643 = vpop.xlane.xlu0 %642
    %v644 = vsel %vm31, %v632, 0.0
    %645 = vadd.xlane.f32.xlu0 %v644
    %v646 = vpop.xlane.xlu0 %645
    %v647 = vrcp.pop 32.0
    %v648 = vmul.f32 %v637, %v647
    %v649 = vmul.f32 %v640, %v647
    %v650 = vmul.f32 %v643, %v647
    %v651 = vmul.f32 %v646, %v647
    %v652 = vmul.f32 %v617, %v617
    %v653 = vmul.f32 %v622, %v622
    %v654 = vmul.f32 %v627, %v627
    %v655 = vmul.f32 %v632, %v632
    %v656 = vsel %vm31, %v652, 0.0
    %657 = vadd.xlane.f32.xlu0 %v656
    %v658 = vpop.xlane.xlu0 %657
    %v659 = vsel %vm31, %v653, 0.0
    %660 = vadd.xlane.f32.xlu0 %v659
    %v661 = vpop.xlane.xlu0 %660
    %v662 = vsel %vm31, %v654, 0.0
    %663 = vadd.xlane.f32.xlu0 %v662
    %v664 = vpop.xlane.xlu0 %663
    %v665 = vsel %vm31, %v655, 0.0
    %666 = vadd.xlane.f32.xlu0 %v665
    %v667 = vpop.xlane.xlu0 %666
    %v668 = vmul.f32 %v658, %v647
    %v669 = vmul.f32 %v661, %v647
    %v670 = vmul.f32 %v664, %v647
    %v671 = vmul.f32 %v667, %v647
    %v672 = vmul.f32 %v648, %v648
    %v673 = vmul.f32 %v649, %v649
    %v674 = vmul.f32 %v650, %v650
    %v675 = vmul.f32 %v651, %v651
    %v676 = vsub.f32 %v668, %v672
    %v677 = vsub.f32 %v669, %v673
    %v678 = vsub.f32 %v670, %v674
    %v679 = vsub.f32 %v671, %v675
    %v680 = vadd.f32 %v676, 1e-05
    %v681 = vadd.f32 %v677, 1e-05
    %v682 = vadd.f32 %v678, 1e-05
    %v683 = vadd.f32 %v679, 1e-05
    %v684 = vrsqrt.pop %v680
    %v685 = vrsqrt.pop %v681
    %v686 = vrsqrt.pop %v682
    %v687 = vrsqrt.pop %v683
    %v688 = vsub.f32 %v617, %v648
    %v689 = vsub.f32 %v622, %v649
    %v690 = vsub.f32 %v627, %v650
    %v691 = vsub.f32 %v632, %v651
    %v692 = vmul.f32 %v688, %v684
    %v693 = vmul.f32 %v689, %v685
    %v694 = vmul.f32 %v690, %v686
    %v695 = vmul.f32 %v691, %v687
    %v696 = vlaneseq
    %v697 = vshrl.u32 %v696, 7
    %v698 = vsub.s32 0, %v697
    %v699 = vrot.slane %v532, %v698
    %v700 = vmul.f32 %v692, %v699
    %v701 = vmul.f32 %v693, %v699
    %v702 = vmul.f32 %v694, %v699
    %v703 = vmul.f32 %v695, %v699
    %v704 = vlaneseq
    %v705 = vshrl.u32 %v704, 7
    %v706 = vsub.s32 0, %v705
    %v707 = vrot.slane %v533, %v706
    %v708 = vadd.f32 %v700, %v707
    %v709 = vadd.f32 %v701, %v707
    %v710 = vadd.f32 %v702, %v707
    %v711 = vadd.f32 %v703, %v707
    %v712 = vtanh.pop %v708
    %v713 = vtanh.pop %v709
    %v714 = vtanh.pop %v710
    %v715 = vtanh.pop %v711
    %v716 = vld [vmem:[%s1 + $0xb8] sm:$0xff]
    %v717 = vld [vmem:[%s1 + $0xc0] sm:$0xff]
    %v718 = vld [vmem:[%s1 + $0xc8] sm:$0xff]
    %v719 = vld [vmem:[%s1 + $0xd0] sm:$0xff]
    %v720 = vld [vmem:[%s1 + $0x11d] sm:$0x1]
    %v721 = vld [vmem:[%s1 + $0x11e] sm:$0x1]
    %v722 = vld [vmem:[%s1 + $0x11f] sm:$0x1]
    %v723 = vlaneseq
    %v724 = vshrl.u32 %v723, 7
    %v725 = vsub.s32 0, %v724
    %v726 = vrot.slane %v720, %v725
    %v728 = vsel %vm31, %v712, 0
    %v731 = vsel %vm31, %v713, 0
    %v734 = vsel %vm31, %v714, 0
    %v737 = vsel %vm31, %v715, 0
    %739 = vmatprep.subr.mxu0 0.0
    %740 = vmatpush1.msra.mxu0 %v716
    %741 = vmatprep.subr.mxu0 0.0
    %742 = vmatpush1.msra.mxu0 %v717
    %743 = vmatprep.subr.mxu0 0.0
    %744 = vmatpush1.msra.mxu0 %v718
    %745 = vmatprep.subr.mxu0 0.0
    %746 = vmatpush1.msra.mxu0 %v719
    %747 = vmatprep.subr.mxu0 0.0
    %748 = vmatpush1.msra.mxu0 0.0
    %749 = vmatprep.subr.mxu0 0.0
    %750 = vmatpush1.msra.mxu0 0.0
    %751 = vmatprep.subr.mxu0 0.0
    %752 = vmatpush1.msra.mxu0 0.0
    %753 = vmatprep.subr.mxu0 0.0
    %754 = vmatpush1.msra.mxu0 0.0
    %755 = vmatprep.subr.mxu0 0.0
    %756 = vmatpush1.msra.mxu0 0.0
    %757 = vmatprep.subr.mxu0 0.0
    %758 = vmatpush1.msra.mxu0 0.0
    %759 = vmatprep.subr.mxu0 0.0
    %760 = vmatpush1.msra.mxu0 0.0
    %761 = vmatprep.subr.mxu0 0.0
    %762 = vmatpush1.msra.mxu0 0.0
    %763 = vmatprep.subr.mxu0 0.0
    %764 = vmatpush1.msra.mxu0 0.0
    %765 = vmatprep.subr.mxu0 0.0
    %766 = vmatpush1.msra.mxu0 0.0
    %767 = vmatprep.subr.mxu0 0.0
    %768 = vmatpush1.msra.mxu0 0.0
    %769 = vmatprep.subr.mxu0 0.0
    %770 = vmatpush1.msra.mxu0 0.0
    %771 = vmatprep.subr.mxu0 0.0
    %772 = vmatpush1.msra.mxu0 0.0
    %773 = vmatprep.subr.mxu0 0.0
    %774 = vmatpush1.msra.mxu0 0.0
    %775 = vmatprep.subr.mxu0 0.0
    %776 = vmatpush1.msra.mxu0 0.0
    %777 = vmatprep.subr.mxu0 0.0
    %778 = vmatpush1.msra.mxu0 0.0
    %779 = vmatprep.subr.mxu0 0.0
    %780 = vmatpush1.msra.mxu0 0.0
    %781 = vmatprep.subr.mxu0 0.0
    %782 = vmatpush1.msra.mxu0 0.0
    %783 = vmatprep.subr.mxu0 0.0
    %784 = vmatpush1.msra.mxu0 0.0
    %785 = vmatprep.subr.mxu0 0.0
    %786 = vmatpush1.msra.mxu0 0.0
    %787 = vmatprep.subr.mxu0 0.0
    %788 = vmatpush1.msra.mxu0 0.0
    %789 = vmatprep.subr.mxu0 0.0
    %790 = vmatpush1.msra.mxu0 0.0
    %791 = vmatprep.subr.mxu0 0.0
    %792 = vmatpush1.msra.mxu0 0.0
    %793 = vmatprep.subr.mxu0 0.0
    %794 = vmatpush1.msra.mxu0 0.0
    %795 = vmatprep.subr.mxu0 0.0
    %796 = vmatpush1.msra.mxu0 0.0
    %797 = vmatprep.subr.mxu0 0.0
    %798 = vmatpush1.msra.mxu0 0.0
    %799 = vmatprep.subr.mxu0 0.0
    %800 = vmatpush1.msra.mxu0 0.0
    %801 = vmatprep.subr.mxu0 0.0
    %802 = vmatpush1.msra.mxu0 0.0
    %803 = vmatprep.mubr.f32.mxu0 0.0
    %804 = vmatmul.mubr.f32.gmra.mrb[0].mxu0 %v728
    %v805 = vpop.f32.mrb[0].mxu0
    %v806 = vadd.f32 %v726, %v805
    %v807 = vpop.f32.mrb[0].mxu0
    %808 = vmatprep.mubr.f32.mxu0 0.0
    %809 = vmatmul.mubr.f32.gmra.mrb[0].mxu0 %v731
    %v810 = vpop.f32.mrb[0].mxu0
    %v811 = vadd.f32 %v726, %v810
    %v812 = vpop.f32.mrb[0].mxu0
    %813 = vmatprep.mubr.f32.mxu0 0.0
    %814 = vmatmul.mubr.f32.gmra.mrb[0].mxu0 %v734
    %v815 = vpop.f32.mrb[0].mxu0
    %v816 = vadd.f32 %v726, %v815
    %v817 = vpop.f32.mrb[0].mxu0
    %818 = vmatprep.mubr.f32.mxu0 0.0
    %819 = vmatmul.mubr.f32.gmra.mrb[0].mxu0 %v737
    %v820 = vpop.f32.mrb[0].mxu0
    %v821 = vadd.f32 %v726, %v820
    %v822 = vpop.f32.mrb[0].mxu0
    %823 = vdwg.mxu0
    %v824 = vsel %vm31, %v806, 0.0
    %825 = vadd.xlane.f32.xlu0 %v824
    %v826 = vpop.xlane.xlu0 %825
    %v827 = vsel %vm31, %v811, 0.0
    %828 = vadd.xlane.f32.xlu0 %v827
    %v829 = vpop.xlane.xlu0 %828
    %v830 = vsel %vm31, %v816, 0.0
    %831 = vadd.xlane.f32.xlu0 %v830
    %v832 = vpop.xlane.xlu0 %831
    %v833 = vsel %vm31, %v821, 0.0
    %834 = vadd.xlane.f32.xlu0 %v833
    %v835 = vpop.xlane.xlu0 %834
    %v836 = vmul.f32 %v826, %v647
    %v837 = vmul.f32 %v829, %v647
    %v838 = vmul.f32 %v832, %v647
    %v839 = vmul.f32 %v835, %v647
    %v840 = vmul.f32 %v806, %v806
    %v841 = vmul.f32 %v811, %v811
    %v842 = vmul.f32 %v816, %v816
    %v843 = vmul.f32 %v821, %v821
    %v844 = vsel %vm31, %v840, 0.0
    %845 = vadd.xlane.f32.xlu0 %v844
    %v846 = vpop.xlane.xlu0 %845
    %v847 = vsel %vm31, %v841, 0.0
    %848 = vadd.xlane.f32.xlu0 %v847
    %v849 = vpop.xlane.xlu0 %848
    %v850 = vsel %vm31, %v842, 0.0
    %851 = vadd.xlane.f32.xlu0 %v850
    %v852 = vpop.xlane.xlu0 %851
    %v853 = vsel %vm31, %v843, 0.0
    %854 = vadd.xlane.f32.xlu0 %v853
    %v855 = vpop.xlane.xlu0 %854
    %v856 = vmul.f32 %v846, %v647
    %v857 = vmul.f32 %v849, %v647
    %v858 = vmul.f32 %v852, %v647
    %v859 = vmul.f32 %v855, %v647
    %v860 = vmul.f32 %v836, %v836
    %v861 = vmul.f32 %v837, %v837
    %v862 = vmul.f32 %v838, %v838
    %v863 = vmul.f32 %v839, %v839
    %v864 = vsub.f32 %v856, %v860
    %v865 = vsub.f32 %v857, %v861
    %v866 = vsub.f32 %v858, %v862
    %v867 = vsub.f32 %v859, %v863
    %v868 = vadd.f32 %v864, 1e-05
    %v869 = vadd.f32 %v865, 1e-05
    %v870 = vadd.f32 %v866, 1e-05
    %v871 = vadd.f32 %v867, 1e-05
    %v872 = vrsqrt.pop %v868
    %v873 = vrsqrt.pop %v869
    %v874 = vrsqrt.pop %v870
    %v875 = vrsqrt.pop %v871
    %v876 = vsub.f32 %v806, %v836
    %v877 = vsub.f32 %v811, %v837
    %v878 = vsub.f32 %v816, %v838
    %v879 = vsub.f32 %v821, %v839
    %v880 = vmul.f32 %v876, %v872
    %v881 = vmul.f32 %v877, %v873
    %v882 = vmul.f32 %v878, %v874
    %v883 = vmul.f32 %v879, %v875
    %v884 = vlaneseq
    %v885 = vshrl.u32 %v884, 7
    %v886 = vsub.s32 0, %v885
    %v887 = vrot.slane %v721, %v886
    %v888 = vmul.f32 %v880, %v887
    %v889 = vmul.f32 %v881, %v887
    %v890 = vmul.f32 %v882, %v887
    %v891 = vmul.f32 %v883, %v887
    %v892 = vlaneseq
    %v893 = vshrl.u32 %v892, 7
    %v894 = vsub.s32 0, %v893
    %v895 = vrot.slane %v722, %v894
    %v896 = vadd.f32 %v888, %v895
    %v897 = vadd.f32 %v889, %v895
    %v898 = vadd.f32 %v890, %v895
    %v899 = vadd.f32 %v891, %v895
    %v900 = vtanh.pop %v896
    %v901 = vtanh.pop %v897
    %v902 = vtanh.pop %v898
    %v903 = vtanh.pop %v899
    %v905 = vsel %vm31, %v24, 0
    %v908 = vsel %vm31, %v25, 0
    %v911 = vsel %vm31, %v26, 0
    %913 = vmatprep.subr.mxu0 0.0
    %914 = vmatpush1.msra.mxu0 %v900
    %915 = vmatprep.subr.mxu0 0.0
    %916 = vmatpush1.msra.mxu0 %v901
    %917 = vmatprep.subr.mxu0 0.0
    %918 = vmatpush1.msra.mxu0 %v902
    %919 = vmatprep.subr.mxu0 0.0
    %920 = vmatpush1.msra.mxu0 %v903
    %921 = vmatprep.subr.mxu0 0.0
    %922 = vmatpush1.msra.mxu0 0.0
    %923 = vmatprep.subr.mxu0 0.0
    %924 = vmatpush1.msra.mxu0 0.0
    %925 = vmatprep.subr.mxu0 0.0
    %926 = vmatpush1.msra.mxu0 0.0
    %927 = vmatprep.subr.mxu0 0.0
    %928 = vmatpush1.msra.mxu0 0.0
    %929 = vmatprep.subr.mxu0 0.0
    %930 = vmatpush1.msra.mxu0 0.0
    %931 = vmatprep.subr.mxu0 0.0
    %932 = vmatpush1.msra.mxu0 0.0
    %933 = vmatprep.subr.mxu0 0.0
    %934 = vmatpush1.msra.mxu0 0.0
    %935 = vmatprep.subr.mxu0 0.0
    %936 = vmatpush1.msra.mxu0 0.0
    %937 = vmatprep.subr.mxu0 0.0
    %938 = vmatpush1.msra.mxu0 0.0
    %939 = vmatprep.subr.mxu0 0.0
    %940 = vmatpush1.msra.mxu0 0.0
    %941 = vmatprep.subr.mxu0 0.0
    %942 = vmatpush1.msra.mxu0 0.0
    %943 = vmatprep.subr.mxu0 0.0
    %944 = vmatpush1.msra.mxu0 0.0
    %945 = vmatprep.subr.mxu0 0.0
    %946 = vmatpush1.msra.mxu0 0.0
    %947 = vmatprep.subr.mxu0 0.0
    %948 = vmatpush1.msra.mxu0 0.0
    %949 = vmatprep.subr.mxu0 0.0
    %950 = vmatpush1.msra.mxu0 0.0
    %951 = vmatprep.subr.mxu0 0.0
    %952 = vmatpush1.msra.mxu0 0.0
    %953 = vmatprep.subr.mxu0 0.0
    %954 = vmatpush1.msra.mxu0 0.0
    %955 = vmatprep.subr.mxu0 0.0
    %956 = vmatpush1.msra.mxu0 0.0
    %957 = vmatprep.subr.mxu0 0.0
    %958 = vmatpush1.msra.mxu0 0.0
    %959 = vmatprep.subr.mxu0 0.0
    %960 = vmatpush1.msra.mxu0 0.0
    %961 = vmatprep.subr.mxu0 0.0
    %962 = vmatpush1.msra.mxu0 0.0
    %963 = vmatprep.subr.mxu0 0.0
    %964 = vmatpush1.msra.mxu0 0.0
    %965 = vmatprep.subr.mxu0 0.0
    %966 = vmatpush1.msra.mxu0 0.0
    %967 = vmatprep.subr.mxu0 0.0
    %968 = vmatpush1.msra.mxu0 0.0
    %969 = vmatprep.subr.mxu0 0.0
    %970 = vmatpush1.msra.mxu0 0.0
    %971 = vmatprep.subr.mxu0 0.0
    %972 = vmatpush1.msra.mxu0 0.0
    %973 = vmatprep.subr.mxu0 0.0
    %974 = vmatpush1.msra.mxu0 0.0
    %975 = vmatprep.subr.mxu0 0.0
    %976 = vmatpush1.msra.mxu0 0.0
    %977 = vmatprep.mubr.f32.mxu0 0.0
    %978 = vmatmul.mubr.f32.gmra.mrb[0].mxu0 %v905
    %v979 = vpop.f32.mrb[0].mxu0
    %v980 = vadd.f32 0.0, %v979
    %v981 = vpop.f32.mrb[0].mxu0
    %982 = vmatprep.mubr.f32.mxu0 0.0
    %983 = vmatmul.mubr.f32.gmra.mrb[0].mxu0 %v908
    %v984 = vpop.f32.mrb[0].mxu0
    %v985 = vadd.f32 0.0, %v984
    %v986 = vpop.f32.mrb[0].mxu0
    %987 = vmatprep.mubr.f32.mxu0 0.0
    %988 = vmatmul.mubr.f32.gmra.mrb[0].mxu0 %v911
    %v989 = vpop.f32.mrb[0].mxu0
    %v990 = vadd.f32 0.0, %v989
    %v991 = vpop.f32.mrb[0].mxu0
    %992 = vdwg.mxu0
    %v993 = vld [vmem:[%s1 + $0xd8] sm:$0xff]
    %v994 = vld [vmem:[%s1 + $0xe0] sm:$0xff]
    %v995 = vld [vmem:[%s1 + $0xe8] sm:$0xff]
    %v996 = vld [vmem:[%s1 + $0xf0] sm:$0xff]
    %v997 = vld [vmem:[%s1 + $0x120] sm:$0x1]
    %v998 = vld [vmem:[%s1 + $0x121] sm:$0x1]
    %v999 = vld [vmem:[%s1 + $0x122] sm:$0x1]
    %v1000 = vlaneseq
    %v1001 = vshrl.u32 %v1000, 7
    %v1002 = vsub.s32 0, %v1001
    %v1003 = vrot.slane %v997, %v1002
    %v1005 = vsel %vm31, %v980, 0
    %v1008 = vsel %vm31, %v985, 0
    %v1011 = vsel %vm31, %v990, 0
    %1013 = vmatprep.subr.mxu0 0.0
    %1014 = vmatpush1.msra.mxu0 %v993
    %1015 = vmatprep.subr.mxu0 0.0
    %1016 = vmatpush1.msra.mxu0 %v994
    %1017 = vmatprep.subr.mxu0 0.0
    %1018 = vmatpush1.msra.mxu0 %v995
    %1019 = vmatprep.subr.mxu0 0.0
    %1020 = vmatpush1.msra.mxu0 %v996
    %1021 = vmatprep.subr.mxu0 0.0
    %1022 = vmatpush1.msra.mxu0 0.0
    %1023 = vmatprep.subr.mxu0 0.0
    %1024 = vmatpush1.msra.mxu0 0.0
    %1025 = vmatprep.subr.mxu0 0.0
    %1026 = vmatpush1.msra.mxu0 0.0
    %1027 = vmatprep.subr.mxu0 0.0
    %1028 = vmatpush1.msra.mxu0 0.0
    %1029 = vmatprep.subr.mxu0 0.0
    %1030 = vmatpush1.msra.mxu0 0.0
    %1031 = vmatprep.subr.mxu0 0.0
    %1032 = vmatpush1.msra.mxu0 0.0
    %1033 = vmatprep.subr.mxu0 0.0
    %1034 = vmatpush1.msra.mxu0 0.0
    %1035 = vmatprep.subr.mxu0 0.0
    %1036 = vmatpush1.msra.mxu0 0.0
    %1037 = vmatprep.subr.mxu0 0.0
    %1038 = vmatpush1.msra.mxu0 0.0
    %1039 = vmatprep.subr.mxu0 0.0
    %1040 = vmatpush1.msra.mxu0 0.0
    %1041 = vmatprep.subr.mxu0 0.0
    %1042 = vmatpush1.msra.mxu0 0.0
    %1043 = vmatprep.subr.mxu0 0.0
    %1044 = vmatpush1.msra.mxu0 0.0
    %1045 = vmatprep.subr.mxu0 0.0
    %1046 = vmatpush1.msra.mxu0 0.0
    %1047 = vmatprep.subr.mxu0 0.0
    %1048 = vmatpush1.msra.mxu0 0.0
    %1049 = vmatprep.subr.mxu0 0.0
    %1050 = vmatpush1.msra.mxu0 0.0
    %1051 = vmatprep.subr.mxu0 0.0
    %1052 = vmatpush1.msra.mxu0 0.0
    %1053 = vmatprep.subr.mxu0 0.0
    %1054 = vmatpush1.msra.mxu0 0.0
    %1055 = vmatprep.subr.mxu0 0.0
    %1056 = vmatpush1.msra.mxu0 0.0
    %1057 = vmatprep.subr.mxu0 0.0
    %1058 = vmatpush1.msra.mxu0 0.0
    %1059 = vmatprep.subr.mxu0 0.0
    %1060 = vmatpush1.msra.mxu0 0.0
    %1061 = vmatprep.subr.mxu0 0.0
    %1062 = vmatpush1.msra.mxu0 0.0
    %1063 = vmatprep.subr.mxu0 0.0
    %1064 = vmatpush1.msra.mxu0 0.0
    %1065 = vmatprep.subr.mxu0 0.0
    %1066 = vmatpush1.msra.mxu0 0.0
    %1067 = vmatprep.subr.mxu0 0.0
    %1068 = vmatpush1.msra.mxu0 0.0
    %1069 = vmatprep.subr.mxu0 0.0
    %1070 = vmatpush1.msra.mxu0 0.0
    %1071 = vmatprep.subr.mxu0 0.0
    %1072 = vmatpush1.msra.mxu0 0.0
    %1073 = vmatprep.subr.mxu0 0.0
    %1074 = vmatpush1.msra.mxu0 0.0
    %1075 = vmatprep.subr.mxu0 0.0
    %1076 = vmatpush1.msra.mxu0 0.0
    %1077 = vmatprep.mubr.f32.mxu0 0.0
    %1078 = vmatmul.mubr.f32.gmra.mrb[0].mxu0 %v1005
    %v1079 = vpop.f32.mrb[0].mxu0
    %v1080 = vadd.f32 %v1003, %v1079
    %v1081 = vpop.f32.mrb[0].mxu0
    %1082 = vmatprep.mubr.f32.mxu0 0.0
    %1083 = vmatmul.mubr.f32.gmra.mrb[0].mxu0 %v1008
    %v1084 = vpop.f32.mrb[0].mxu0
    %v1085 = vadd.f32 %v1003, %v1084
    %v1086 = vpop.f32.mrb[0].mxu0
    %1087 = vmatprep.mubr.f32.mxu0 0.0
    %1088 = vmatmul.mubr.f32.gmra.mrb[0].mxu0 %v1011
    %v1089 = vpop.f32.mrb[0].mxu0
    %v1090 = vadd.f32 %v1003, %v1089
    %v1091 = vpop.f32.mrb[0].mxu0
    %1092 = vdwg.mxu0
    %v1093 = vsel %vm31, %v1080, 0.0
    %1094 = vadd.xlane.f32.xlu0 %v1093
    %v1095 = vpop.xlane.xlu0 %1094
    %v1096 = vsel %vm31, %v1085, 0.0
    %1097 = vadd.xlane.f32.xlu0 %v1096
    %v1098 = vpop.xlane.xlu0 %1097
    %v1099 = vsel %vm31, %v1090, 0.0
    %1100 = vadd.xlane.f32.xlu0 %v1099
    %v1101 = vpop.xlane.xlu0 %1100
    %v1102 = vmul.f32 %v1095, %v647
    %v1103 = vmul.f32 %v1098, %v647
    %v1104 = vmul.f32 %v1101, %v647
    %v1105 = vmul.f32 %v1080, %v1080
    %v1106 = vmul.f32 %v1085, %v1085
    %v1107 = vmul.f32 %v1090, %v1090
    %v1108 = vsel %vm31, %v1105, 0.0
    %1109 = vadd.xlane.f32.xlu0 %v1108
    %v1110 = vpop.xlane.xlu0 %1109
    %v1111 = vsel %vm31, %v1106, 0.0
    %1112 = vadd.xlane.f32.xlu0 %v1111
    %v1113 = vpop.xlane.xlu0 %1112
    %v1114 = vsel %vm31, %v1107, 0.0
    %1115 = vadd.xlane.f32.xlu0 %v1114
    %v1116 = vpop.xlane.xlu0 %1115
    %v1117 = vmul.f32 %v1110, %v647
    %v1118 = vmul.f32 %v1113, %v647
    %v1119 = vmul.f32 %v1116, %v647
    %v1120 = vmul.f32 %v1102, %v1102
    %v1121 = vmul.f32 %v1103, %v1103
    %v1122 = vmul.f32 %v1104, %v1104
    %v1123 = vsub.f32 %v1117, %v1120
    %v1124 = vsub.f32 %v1118, %v1121
    %v1125 = vsub.f32 %v1119, %v1122
    %v1126 = vadd.f32 %v1123, 1e-05
    %v1127 = vadd.f32 %v1124, 1e-05
    %v1128 = vadd.f32 %v1125, 1e-05
    %v1129 = vrsqrt.pop %v1126
    %v1130 = vrsqrt.pop %v1127
    %v1131 = vrsqrt.pop %v1128
    %v1132 = vsub.f32 %v1080, %v1102
    %v1133 = vsub.f32 %v1085, %v1103
    %v1134 = vsub.f32 %v1090, %v1104
    %v1135 = vmul.f32 %v1132, %v1129
    %v1136 = vmul.f32 %v1133, %v1130
    %v1137 = vmul.f32 %v1134, %v1131
    %v1138 = vlaneseq
    %v1139 = vshrl.u32 %v1138, 7
    %v1140 = vsub.s32 0, %v1139
    %v1141 = vrot.slane %v998, %v1140
    %v1142 = vmul.f32 %v1135, %v1141
    %v1143 = vmul.f32 %v1136, %v1141
    %v1144 = vmul.f32 %v1137, %v1141
    %v1145 = vlaneseq
    %v1146 = vshrl.u32 %v1145, 7
    %v1147 = vsub.s32 0, %v1146
    %v1148 = vrot.slane %v999, %v1147
    %v1149 = vadd.f32 %v1142, %v1148
    %v1150 = vadd.f32 %v1143, %v1148
    %v1151 = vadd.f32 %v1144, %v1148
    %v1152 = vtanh.pop %v1149
    %v1153 = vtanh.pop %v1150
    %v1154 = vtanh.pop %v1151
    %v1155 = vld [vmem:[%s1 + $0xf8] sm:$0xff]
    %v1156 = vld [vmem:[%s1 + $0x100] sm:$0xff]
    %v1157 = vld [vmem:[%s1 + $0x108] sm:$0xff]
    %v1158 = vld [vmem:[%s1 + $0x110] sm:$0xff]
    %v1159 = vld [vmem:[%s1 + $0x123] sm:$0x1]
    %v1160 = vld [vmem:[%s1 + $0x124] sm:$0x1]
    %v1161 = vld [vmem:[%s1 + $0x125] sm:$0x1]
    %v1162 = vlaneseq
    %v1163 = vshrl.u32 %v1162, 7
    %v1164 = vsub.s32 0, %v1163
    %v1165 = vrot.slane %v1159, %v1164
    %v1167 = vsel %vm31, %v1152, 0
    %v1170 = vsel %vm31, %v1153, 0
    %v1173 = vsel %vm31, %v1154, 0
    %1175 = vmatprep.subr.mxu0 0.0
    %1176 = vmatpush1.msra.mxu0 %v1155
    %1177 = vmatprep.subr.mxu0 0.0
    %1178 = vmatpush1.msra.mxu0 %v1156
    %1179 = vmatprep.subr.mxu0 0.0
    %1180 = vmatpush1.msra.mxu0 %v1157
    %1181 = vmatprep.subr.mxu0 0.0
    %1182 = vmatpush1.msra.mxu0 %v1158
    %1183 = vmatprep.subr.mxu0 0.0
    %1184 = vmatpush1.msra.mxu0 0.0
    %1185 = vmatprep.subr.mxu0 0.0
    %1186 = vmatpush1.msra.mxu0 0.0
    %1187 = vmatprep.subr.mxu0 0.0
    %1188 = vmatpush1.msra.mxu0 0.0
    %1189 = vmatprep.subr.mxu0 0.0
    %1190 = vmatpush1.msra.mxu0 0.0
    %1191 = vmatprep.subr.mxu0 0.0
    %1192 = vmatpush1.msra.mxu0 0.0
    %1193 = vmatprep.subr.mxu0 0.0
    %1194 = vmatpush1.msra.mxu0 0.0
    %1195 = vmatprep.subr.mxu0 0.0
    %1196 = vmatpush1.msra.mxu0 0.0
    %1197 = vmatprep.subr.mxu0 0.0
    %1198 = vmatpush1.msra.mxu0 0.0
    %1199 = vmatprep.subr.mxu0 0.0
    %1200 = vmatpush1.msra.mxu0 0.0
    %1201 = vmatprep.subr.mxu0 0.0
    %1202 = vmatpush1.msra.mxu0 0.0
    %1203 = vmatprep.subr.mxu0 0.0
    %1204 = vmatpush1.msra.mxu0 0.0
    %1205 = vmatprep.subr.mxu0 0.0
    %1206 = vmatpush1.msra.mxu0 0.0
    %1207 = vmatprep.subr.mxu0 0.0
    %1208 = vmatpush1.msra.mxu0 0.0
    %1209 = vmatprep.subr.mxu0 0.0
    %1210 = vmatpush1.msra.mxu0 0.0
    %1211 = vmatprep.subr.mxu0 0.0
    %1212 = vmatpush1.msra.mxu0 0.0
    %1213 = vmatprep.subr.mxu0 0.0
    %1214 = vmatpush1.msra.mxu0 0.0
    %1215 = vmatprep.subr.mxu0 0.0
    %1216 = vmatpush1.msra.mxu0 0.0
    %1217 = vmatprep.subr.mxu0 0.0
    %1218 = vmatpush1.msra.mxu0 0.0
    %1219 = vmatprep.subr.mxu0 0.0
    %1220 = vmatpush1.msra.mxu0 0.0
    %1221 = vmatprep.subr.mxu0 0.0
    %1222 = vmatpush1.msra.mxu0 0.0
    %1223 = vmatprep.subr.mxu0 0.0
    %1224 = vmatpush1.msra.mxu0 0.0
    %1225 = vmatprep.subr.mxu0 0.0
    %1226 = vmatpush1.msra.mxu0 0.0
    %1227 = vmatprep.subr.mxu0 0.0
    %1228 = vmatpush1.msra.mxu0 0.0
    %1229 = vmatprep.subr.mxu0 0.0
    %1230 = vmatpush1.msra.mxu0 0.0
    %1231 = vmatprep.subr.mxu0 0.0
    %1232 = vmatpush1.msra.mxu0 0.0
    %1233 = vmatprep.subr.mxu0 0.0
    %1234 = vmatpush1.msra.mxu0 0.0
    %1235 = vmatprep.subr.mxu0 0.0
    %1236 = vmatpush1.msra.mxu0 0.0
    %1237 = vmatprep.subr.mxu0 0.0
    %1238 = vmatpush1.msra.mxu0 0.0
    %1239 = vmatprep.mubr.f32.mxu0 0.0
    %1240 = vmatmul.mubr.f32.gmra.mrb[0].mxu0 %v1167
    %v1241 = vpop.f32.mrb[0].mxu0
    %v1242 = vadd.f32 %v1165, %v1241
    %v1243 = vpop.f32.mrb[0].mxu0
    %1244 = vmatprep.mubr.f32.mxu0 0.0
    %1245 = vmatmul.mubr.f32.gmra.mrb[0].mxu0 %v1170
    %v1246 = vpop.f32.mrb[0].mxu0
    %v1247 = vadd.f32 %v1165, %v1246
    %v1248 = vpop.f32.mrb[0].mxu0
    %1249 = vmatprep.mubr.f32.mxu0 0.0
    %1250 = vmatmul.mubr.f32.gmra.mrb[0].mxu0 %v1173
    %v1251 = vpop.f32.mrb[0].mxu0
    %v1252 = vadd.f32 %v1165, %v1251
    %v1253 = vpop.f32.mrb[0].mxu0
    %1254 = vdwg.mxu0
    %v1255 = vsel %vm31, %v1242, 0.0
    %1256 = vadd.xlane.f32.xlu0 %v1255
    %v1257 = vpop.xlane.xlu0 %1256
    %v1258 = vsel %vm31, %v1247, 0.0
    %1259 = vadd.xlane.f32.xlu0 %v1258
    %v1260 = vpop.xlane.xlu0 %1259
    %v1261 = vsel %vm31, %v1252, 0.0
    %1262 = vadd.xlane.f32.xlu0 %v1261
    %v1263 = vpop.xlane.xlu0 %1262
    %v1264 = vmul.f32 %v1257, %v647
    %v1265 = vmul.f32 %v1260, %v647
    %v1266 = vmul.f32 %v1263, %v647
    %v1267 = vmul.f32 %v1242, %v1242
    %v1268 = vmul.f32 %v1247, %v1247
    %v1269 = vmul.f32 %v1252, %v1252
    %v1270 = vsel %vm31, %v1267, 0.0
    %1271 = vadd.xlane.f32.xlu0 %v1270
    %v1272 = vpop.xlane.xlu0 %1271
    %v1273 = vsel %vm31, %v1268, 0.0
    %1274 = vadd.xlane.f32.xlu0 %v1273
    %v1275 = vpop.xlane.xlu0 %1274
    %v1276 = vsel %vm31, %v1269, 0.0
    %1277 = vadd.xlane.f32.xlu0 %v1276
    %v1278 = vpop.xlane.xlu0 %1277
    %v1279 = vmul.f32 %v1272, %v647
    %v1280 = vmul.f32 %v1275, %v647
    %v1281 = vmul.f32 %v1278, %v647
    %v1282 = vmul.f32 %v1264, %v1264
    %v1283 = vmul.f32 %v1265, %v1265
    %v1284 = vmul.f32 %v1266, %v1266
    %v1285 = vsub.f32 %v1279, %v1282
    %v1286 = vsub.f32 %v1280, %v1283
    %v1287 = vsub.f32 %v1281, %v1284
    %v1288 = vadd.f32 %v1285, 1e-05
    %v1289 = vadd.f32 %v1286, 1e-05
    %v1290 = vadd.f32 %v1287, 1e-05
    %v1291 = vrsqrt.pop %v1288
    %v1292 = vrsqrt.pop %v1289
    %v1293 = vrsqrt.pop %v1290
    %v1294 = vsub.f32 %v1242, %v1264
    %v1295 = vsub.f32 %v1247, %v1265
    %v1296 = vsub.f32 %v1252, %v1266
    %v1297 = vmul.f32 %v1294, %v1291
    %v1298 = vmul.f32 %v1295, %v1292
    %v1299 = vmul.f32 %v1296, %v1293
    %v1300 = vlaneseq
    %v1301 = vshrl.u32 %v1300, 7
    %v1302 = vsub.s32 0, %v1301
    %v1303 = vrot.slane %v1160, %v1302
    %v1304 = vmul.f32 %v1297, %v1303
    %v1305 = vmul.f32 %v1298, %v1303
    %v1306 = vmul.f32 %v1299, %v1303
    %v1307 = vlaneseq
    %v1308 = vshrl.u32 %v1307, 7
    %v1309 = vsub.s32 0, %v1308
    %v1310 = vrot.slane %v1161, %v1309
    %v1311 = vadd.f32 %v1304, %v1310
    %v1312 = vadd.f32 %v1305, %v1310
    %v1313 = vadd.f32 %v1306, %v1310
    %v1314 = vtanh.pop %v1311
    %v1315 = vtanh.pop %v1312
    %v1316 = vtanh.pop %v1313
    %v1317 = vsel %vm31, %v1314, 0.0
    %v1318 = vsel %vm31, %v1315, 0.0
    %v1319 = vsel %vm31, %v1316, 0.0
    %1320 = vst [vmem:[#allocation2] sm:$0xff] %v1317
    %1321 = vst [vmem:[#allocation2 + $0x8] sm:$0xff] %v1318
    %1322 = vst [vmem:[#allocation2 + $0x10] sm:$0xff] %v1319
    // Predicated region
    $region10: #{tpu_custom_call.1} parent=1 // pred_check
      _
    $region11: #{tpu_custom_call.1} parent=1 // pred_check_branch
      %1324 = sbr.rel (0) target = $region13
    $region12: #{tpu_custom_call.1} parent=1 // pred_region
      %s1326 = ssub.s32 384, 384
      %1327 = vsyncadd [#allocation3], %s1326
      %s1328 = sshll.u32 [#allocation2], 4
      %s1329 = int_to_ptr.vmem [resolvable:$true] %s1328
      %1334 = dma.vmem_to_hbm [thread:$0]  %s1329, 384, %s2, [#allocation3], 128, 128, 8
    $region13: #{tpu_custom_call.1} parent=1 // pred_fallthru
      _
    // Predicated region
    $region14: #{tpu_custom_call.1} parent=1 // pred_check
      _
    $region15: #{tpu_custom_call.1} parent=1 // pred_check_branch
      %1336 = sbr.rel (0) target = $region17
    $region16: #{tpu_custom_call.1} parent=1 // pred_region
      %1337 = dma.done [#allocation3], 384
    $region17: #{tpu_custom_call.1} parent=1 // pred_fallthru
      _
    %1338 = vsyncpa [#allocation3], 1

</llo_original>
